<compile_context>
chip_gen: v6e
topology: v6e:2x2x1
jax: 0.10.0
libtpu: 0.0.40
codegen_flags: <defaults>
</compile_context>

<pallas_src>
import functools
import math

import jax
import jax.numpy as jnp
from jax.experimental import pallas as pl
from jax.experimental.pallas import tpu as pltpu


def _encoder_conv_kernel(x_ref, w_in_ref, b_in_ref, w_o_ref, b_o_ref,
                         g1_ref, be1_ref, w1_ref, b1_ref, w2_ref, b2_ref,
                         g2_ref, be2_ref, wc_ref, bc_ref,
                         out_ref, pad_sc, *, nheads, eps):
    """Fused TransformerEncoderLayer + Conv1d + ReLU for one batch element.

    x_ref:    (S, D)       this batch element's sequence
    w_in_ref: (D, 3D)      in_proj_weight^T        b_in_ref: (1, 3D)
    w_o_ref:  (D, D)       out_proj.weight^T       b_o_ref:  (1, D)
    g1/be1:   (1, D)       LayerNorm1 gamma/beta
    w1_ref:   (D, F)       linear1.weight^T        b1_ref:   (1, F)
    w2_ref:   (F, D)       linear2.weight^T        b2_ref:   (1, D)
    g2/be2:   (1, D)       LayerNorm2 gamma/beta
    wc_ref:   (K, D, D)    conv weight taps, tap k = weight[:, :, k]^T
    bc_ref:   (1, D)       conv bias
    out_ref:  (L_full, D)  stride-1 conv output (ReLU applied)
    pad_sc:   (S+2, D) f32 VMEM scratch for the padded conv input
    """
    x = x_ref[...].astype(jnp.float32)          # (S, D)
    S, D = x.shape
    Dh = D // nheads
    scale = 1.0 / math.sqrt(Dh)

    # ---- multi-head self-attention (Q = K = V = x) -------------------------
    qkv = jnp.dot(x, w_in_ref[...], preferred_element_type=jnp.float32) + b_in_ref[...]
    q = qkv[:, 0:D] * scale
    k = qkv[:, D:2 * D]
    v = qkv[:, 2 * D:3 * D]

    w_o = w_o_ref[...]                          # (D, D)
    attn = jnp.zeros((S, D), jnp.float32) + b_o_ref[...]
    for h in range(nheads):
        sl = slice(h * Dh, (h + 1) * Dh)
        qh, kh, vh = q[:, sl], k[:, sl], v[:, sl]
        s = jnp.einsum('qd,kd->qk', qh, kh,
                       preferred_element_type=jnp.float32)      # (S, S)
        s = s - jnp.max(s, axis=-1, keepdims=True)
        p = jnp.exp(s)
        p = p / jnp.sum(p, axis=-1, keepdims=True)
        oh = jnp.dot(p, vh, preferred_element_type=jnp.float32)  # (S, Dh)
        # fold the output projection per head -> no concatenate needed
        attn = attn + jnp.dot(oh, w_o[sl, :],
                              preferred_element_type=jnp.float32)

    def _layer_norm(val, g_ref, b_ref):
        mu = jnp.mean(val, axis=-1, keepdims=True)
        var = jnp.mean(jnp.square(val - mu), axis=-1, keepdims=True)
        return (val - mu) * jax.lax.rsqrt(var + eps) * g_ref[...] + b_ref[...]

    # ---- add & norm, feed-forward, add & norm ------------------------------
    x1 = _layer_norm(x + attn, g1_ref, be1_ref)
    h1 = jnp.maximum(
        jnp.dot(x1, w1_ref[...], preferred_element_type=jnp.float32) + b1_ref[...],
        0.0)
    h2 = jnp.dot(h1, w2_ref[...], preferred_element_type=jnp.float32) + b2_ref[...]
    x2 = _layer_norm(x1 + h2, g2_ref, be2_ref)

    # ---- Conv1d over time (padding=1), stride-1 full output, then ReLU -----
    K = wc_ref.shape[0]
    L_full = S + 2 - K + 1
    pad_sc[...] = jnp.zeros_like(pad_sc)
    pad_sc[1:S + 1, :] = x2
    y = jnp.zeros((L_full, D), jnp.float32) + bc_ref[...]
    for kk in range(K):
        y = y + jnp.dot(pad_sc[kk:kk + L_full, :], wc_ref[kk],
                        preferred_element_type=jnp.float32)
    out_ref[...] = jnp.maximum(y, 0.0).astype(out_ref.dtype)


def transformer_encoder_conv1d_forward(src, params, *, nheads, kernel_size,
                                       stride, eps=1e-5):
    """src: (S, B, D) like the PyTorch module. Returns (L_out, B, D)."""
    (w_in, b_in, w_o, b_o, g1, be1, w1, b1, w2, b2, g2, be2, wc, bc) = params
    S, B, D = src.shape
    K = kernel_size
    Dff = w1.shape[1]
    L_full = S + 2 - K + 1          # stride-1 conv output length (padding=1)
    L_out = (S + 2 - K) // stride + 1

    x_bf = jnp.transpose(src, (1, 0, 2))   # (B, S, D) — batch-major for the grid

    kernel = functools.partial(_encoder_conv_kernel, nheads=nheads, eps=eps)
    out_bf = pl.pallas_call(
        kernel,
        out_shape=jax.ShapeDtypeStruct((B, L_full, D), src.dtype),
        grid_spec=pltpu.PrefetchScalarGridSpec(
            num_scalar_prefetch=0,
            grid=(B,),
            in_specs=[
                pl.BlockSpec((None, S, D), lambda b: (b, 0, 0)),     # x (per batch)
                pl.BlockSpec((D, 3 * D), lambda b: (0, 0)),          # in_proj W^T
                pl.BlockSpec((1, 3 * D), lambda b: (0, 0)),          # in_proj b
                pl.BlockSpec((D, D), lambda b: (0, 0)),              # out_proj W^T
                pl.BlockSpec((1, D), lambda b: (0, 0)),              # out_proj b
                pl.BlockSpec((1, D), lambda b: (0, 0)),              # norm1 gamma
                pl.BlockSpec((1, D), lambda b: (0, 0)),              # norm1 beta
                pl.BlockSpec((D, Dff), lambda b: (0, 0)),            # linear1 W^T
                pl.BlockSpec((1, Dff), lambda b: (0, 0)),            # linear1 b
                pl.BlockSpec((Dff, D), lambda b: (0, 0)),            # linear2 W^T
                pl.BlockSpec((1, D), lambda b: (0, 0)),              # linear2 b
                pl.BlockSpec((1, D), lambda b: (0, 0)),              # norm2 gamma
                pl.BlockSpec((1, D), lambda b: (0, 0)),              # norm2 beta
                pl.BlockSpec((K, D, D), lambda b: (0, 0, 0)),        # conv taps
                pl.BlockSpec((1, D), lambda b: (0, 0)),              # conv bias
            ],
            out_specs=pl.BlockSpec((None, L_full, D), lambda b: (b, 0, 0)),
            scratch_shapes=[pltpu.VMEM((S + 2, D), jnp.float32)],
        ),
        compiler_params=pltpu.CompilerParams(
            dimension_semantics=("parallel",),   # batch elements are independent
        ),
    )(x_bf, w_in, b_in, w_o, b_o, g1, be1, w1, b1, w2, b2, g2, be2, wc, bc)

    out = jnp.transpose(out_bf, (1, 0, 2))       # (L_full, B, D)
    # strided Conv1d == subsampled stride-1 conv (no-op when stride == 1)
    return out[:(L_out - 1) * stride + 1:stride]


def _reference_forward(src, params, *, nheads, kernel_size, stride, eps=1e-5):
    """Pure-JAX reference using identical math (for correctness checking)."""
    (w_in, b_in, w_o, b_o, g1, be1, w1, b1, w2, b2, g2, be2, wc, bc) = params
    S, B, D = src.shape
    Dh = D // nheads
    scale = 1.0 / math.sqrt(Dh)
    K = kernel_size
    L_full = S + 2 - K + 1
    L_out = (S + 2 - K) // stride + 1

    outs = []
    for b in range(B):
        x = src[:, b, :].astype(jnp.float32)
        qkv = x @ w_in + b_in
        q, k, v = qkv[:, :D] * scale, qkv[:, D:2 * D], qkv[:, 2 * D:]
        attn = jnp.zeros((S, D), jnp.float32) + b_o
        for h in range(nheads):
            sl = slice(h * Dh, (h + 1) * Dh)
            s = q[:, sl] @ k[:, sl].T
            p = jax.nn.softmax(s, axis=-1)
            attn = attn + (p @ v[:, sl]) @ w_o[sl, :]

        def ln(val, g, bt):
            mu = val.mean(-1, keepdims=True)
            var = ((val - mu) ** 2).mean(-1, keepdims=True)
            return (val - mu) / jnp.sqrt(var + eps) * g + bt

        x1 = ln(x + attn, g1, be1)
        h1 = jnp.maximum(x1 @ w1 + b1, 0.0)
        x2 = ln(x1 + h1 @ w2 + b2, g2, be2)

        xp = jnp.concatenate([jnp.zeros((1, D)), x2, jnp.zeros((1, D))], axis=0)
        y = jnp.zeros((L_full, D), jnp.float32) + bc
        for kk in range(K):
            y = y + xp[kk:kk + L_full, :] @ wc[kk]
        outs.append(jnp.maximum(y, 0.0))
    out = jnp.stack(outs, axis=1)                # (L_full, B, D)
    return out[:(L_out - 1) * stride + 1:stride]


def init_params(key, dim_model, nheads, dim_feedforward, kernel_size,
                dtype=jnp.float32):
    """Deterministic parameters (PyTorch-like layouts, pre-transposed)."""
    D, F, K = dim_model, dim_feedforward, kernel_size
    ks = jax.random.split(key, 8)

    def u(k, shape, bound):
        return jax.random.uniform(k, shape, dtype, -bound, bound)

    kd = 1.0 / math.sqrt(D)
    kf = 1.0 / math.sqrt(F)
    kc = 1.0 / math.sqrt(D * K)

    w_in = u(ks[0], (3 * D, D), kd)          # in_proj_weight
    b_in = jnp.zeros((3 * D,), dtype)
    w_o = u(ks[1], (D, D), kd)               # out_proj.weight
    b_o = jnp.zeros((D,), dtype)
    g1 = jnp.ones((D,), dtype)
    be1 = jnp.zeros((D,), dtype)
    w1 = u(ks[2], (F, D), kd)                # linear1.weight
    b1 = u(ks[3], (F,), kd)
    w2 = u(ks[4], (D, F), kf)                # linear2.weight
    b2 = u(ks[5], (D,), kf)
    g2 = jnp.ones((D,), dtype)
    be2 = jnp.zeros((D,), dtype)
    wc = u(ks[6], (D, D, K), kc)             # conv1d.weight (Cout, Cin, K)
    bc = u(ks[7], (D,), kc)

    return (
        w_in.T,                              # (D, 3D)
        b_in.reshape(1, -1),                 # (1, 3D)
        w_o.T,                               # (D, D)
        b_o.reshape(1, -1),                  # (1, D)
        g1.reshape(1, -1), be1.reshape(1, -1),
        w1.T,                                # (D, F)
        b1.reshape(1, -1),                   # (1, F)
        w2.T,                                # (F, D)
        b2.reshape(1, -1),                   # (1, D)
        g2.reshape(1, -1), be2.reshape(1, -1),
        jnp.transpose(wc, (2, 1, 0)),        # (K, Cin, Cout)
        bc.reshape(1, -1),                   # (1, D)
    )


if __name__ == "__main__":
    # Module config: TransformerEncoderLayerWithConv1d(dim_model, nheads,
    #                dim_feedforward, dropout, kernel_size, stride)
    dim_model, nheads, dim_feedforward = 32, 4, 64
    dropout, kernel_size, stride = 0.0, 3, 1
    seqlen, batch = 8, 2

    key = jax.random.PRNGKey(0)
    kp, kx = jax.random.split(key)
    params = init_params(kp, dim_model, nheads, dim_feedforward, kernel_size)
    src = jax.random.normal(kx, (seqlen, batch, dim_model), jnp.float32)

    fwd = jax.jit(functools.partial(transformer_encoder_conv1d_forward,
                                    nheads=nheads, kernel_size=kernel_size,
                                    stride=stride))
    out = fwd(src, params)
    jax.block_until_ready(out)

    L_out = (seqlen + 2 * 1 - kernel_size) // stride + 1
    assert out.shape == (L_out, batch, dim_model), out.shape
    assert bool(jnp.all(jnp.isfinite(out)))

    ref = _reference_forward(src, params, nheads=nheads,
                             kernel_size=kernel_size, stride=stride)
    max_err = float(jnp.max(jnp.abs(out - ref)))
    assert max_err < 1e-4, max_err

    print("KERNEL_OK")
</pallas_src>

<mosaic_0001>
module attributes {stable_mosaic.version = 11 : i64} {
  func.func @_encoder_conv_kernel(%arg0: i32, %arg1: memref<1x8x32xf32, #tpu.memory_space<vmem>>, %arg2: memref<32x96xf32, #tpu.memory_space<vmem>>, %arg3: memref<1x96xf32, #tpu.memory_space<vmem>>, %arg4: memref<32x32xf32, #tpu.memory_space<vmem>>, %arg5: memref<1x32xf32, #tpu.memory_space<vmem>>, %arg6: memref<1x32xf32, #tpu.memory_space<vmem>>, %arg7: memref<1x32xf32, #tpu.memory_space<vmem>>, %arg8: memref<32x64xf32, #tpu.memory_space<vmem>>, %arg9: memref<1x64xf32, #tpu.memory_space<vmem>>, %arg10: memref<64x32xf32, #tpu.memory_space<vmem>>, %arg11: memref<1x32xf32, #tpu.memory_space<vmem>>, %arg12: memref<1x32xf32, #tpu.memory_space<vmem>>, %arg13: memref<1x32xf32, #tpu.memory_space<vmem>>, %arg14: memref<3x32x32xf32, #tpu.memory_space<vmem>>, %arg15: memref<1x32xf32, #tpu.memory_space<vmem>>, %arg16: memref<1x8x32xf32, #tpu.memory_space<vmem>>, %arg17: memref<10x32xf32, #tpu.memory_space<vmem>>) attributes {dimension_semantics = [#tpu.dimension_semantics<parallel>], iteration_bounds = array<i64: 2>, scalar_prefetch = 0 : i64, scratch_operands = 1 : i64, tpu.core_type = #tpu.core_type<tc>, window_params = [{transform_indices = @transform_0, window_bounds = array<i64: 1, 8, 32>}, {pipeline_mode = #tpu.pipeline_mode<synchronous>, transform_indices = @transform_1, window_bounds = array<i64: 32, 96>}, {pipeline_mode = #tpu.pipeline_mode<synchronous>, transform_indices = @transform_2, window_bounds = array<i64: 1, 96>}, {pipeline_mode = #tpu.pipeline_mode<synchronous>, transform_indices = @transform_3, window_bounds = array<i64: 32, 32>}, {pipeline_mode = #tpu.pipeline_mode<synchronous>, transform_indices = @transform_4, window_bounds = array<i64: 1, 32>}, {pipeline_mode = #tpu.pipeline_mode<synchronous>, transform_indices = @transform_5, window_bounds = array<i64: 1, 32>}, {pipeline_mode = #tpu.pipeline_mode<synchronous>, transform_indices = @transform_6, window_bounds = array<i64: 1, 32>}, {pipeline_mode = #tpu.pipeline_mode<synchronous>, transform_indices = @transform_7, window_bounds = array<i64: 32, 64>}, {pipeline_mode = #tpu.pipeline_mode<synchronous>, transform_indices = @transform_8, window_bounds = array<i64: 1, 64>}, {pipeline_mode = #tpu.pipeline_mode<synchronous>, transform_indices = @transform_9, window_bounds = array<i64: 64, 32>}, {pipeline_mode = #tpu.pipeline_mode<synchronous>, transform_indices = @transform_10, window_bounds = array<i64: 1, 32>}, {pipeline_mode = #tpu.pipeline_mode<synchronous>, transform_indices = @transform_11, window_bounds = array<i64: 1, 32>}, {pipeline_mode = #tpu.pipeline_mode<synchronous>, transform_indices = @transform_12, window_bounds = array<i64: 1, 32>}, {pipeline_mode = #tpu.pipeline_mode<synchronous>, transform_indices = @transform_13, window_bounds = array<i64: 3, 32, 32>}, {pipeline_mode = #tpu.pipeline_mode<synchronous>, transform_indices = @transform_14, window_bounds = array<i64: 1, 32>}, {transform_indices = @transform_15, window_bounds = array<i64: 1, 8, 32>}]} {
    %c0 = arith.constant 0 : index
    %c0_0 = arith.constant 0 : index
    %c0_1 = arith.constant 0 : index
    %0 = vector.load %arg1[%c0, %c0_0, %c0_1] : memref<1x8x32xf32, #tpu.memory_space<vmem>>, vector<1x8x32xf32>
    %1 = vector.shape_cast %0 : vector<1x8x32xf32> to vector<8x32xf32>
    %c0_2 = arith.constant 0 : index
    %c0_3 = arith.constant 0 : index
    %2 = vector.load %arg2[%c0_2, %c0_3] : memref<32x96xf32, #tpu.memory_space<vmem>>, vector<32x96xf32>
    %cst = arith.constant dense<0.000000e+00> : vector<8x96xf32>
    %3 = tpu.matmul %1, %2, %cst {dimension_numbers = #tpu.dot_dimension_numbers<[1], [0], [0], [1], [0, 0, 1, 1], [], []>} : vector<8x32xf32>, vector<32x96xf32>, vector<8x96xf32> -> vector<8x96xf32>
    %c0_4 = arith.constant 0 : index
    %c0_5 = arith.constant 0 : index
    %4 = vector.load %arg3[%c0_4, %c0_5] : memref<1x96xf32, #tpu.memory_space<vmem>>, vector<1x96xf32>
    %5 = vector.broadcast %4 : vector<1x96xf32> to vector<8x96xf32>
    %6 = arith.addf %3, %5 : vector<8x96xf32>
    %7 = vector.extract_strided_slice %6 {offsets = [0, 0], sizes = [8, 32], strides = [1, 1]} : vector<8x96xf32> to vector<8x32xf32>
    %cst_6 = arith.constant 0.353553385 : f32
    %8 = vector.broadcast %cst_6 : f32 to vector<8x32xf32>
    %9 = arith.mulf %7, %8 : vector<8x32xf32>
    %10 = vector.extract_strided_slice %6 {offsets = [0, 32], sizes = [8, 32], strides = [1, 1]} : vector<8x96xf32> to vector<8x32xf32>
    %11 = vector.extract_strided_slice %6 {offsets = [0, 64], sizes = [8, 32], strides = [1, 1]} : vector<8x96xf32> to vector<8x32xf32>
    %c0_7 = arith.constant 0 : index
    %c0_8 = arith.constant 0 : index
    %12 = vector.load %arg4[%c0_7, %c0_8] : memref<32x32xf32, #tpu.memory_space<vmem>>, vector<32x32xf32>
    %cst_9 = arith.constant 0.000000e+00 : f32
    %13 = vector.broadcast %cst_9 : f32 to vector<8x32xf32>
    %c0_10 = arith.constant 0 : index
    %c0_11 = arith.constant 0 : index
    %14 = vector.load %arg5[%c0_10, %c0_11] : memref<1x32xf32, #tpu.memory_space<vmem>>, vector<1x32xf32>
    %15 = vector.broadcast %14 : vector<1x32xf32> to vector<8x32xf32>
    %16 = arith.addf %13, %15 : vector<8x32xf32>
    %17 = vector.extract_strided_slice %9 {offsets = [0, 0], sizes = [8, 8], strides = [1, 1]} : vector<8x32xf32> to vector<8x8xf32>
    %18 = vector.extract_strided_slice %10 {offsets = [0, 0], sizes = [8, 8], strides = [1, 1]} : vector<8x32xf32> to vector<8x8xf32>
    %19 = vector.extract_strided_slice %11 {offsets = [0, 0], sizes = [8, 8], strides = [1, 1]} : vector<8x32xf32> to vector<8x8xf32>
    "tpu.trace_start"() <{level = 10 : i32, message = "qd,kd->qk"}> : () -> ()
    %cst_12 = arith.constant dense<0.000000e+00> : vector<8x8xf32>
    %20 = tpu.matmul %17, %18, %cst_12 {dimension_numbers = #tpu.dot_dimension_numbers<[1], [1], [0], [0], [0, 0, 1, 0], [], []>} : vector<8x8xf32>, vector<8x8xf32>, vector<8x8xf32> -> vector<8x8xf32>
    "tpu.trace_stop"() : () -> ()
    %cst_13 = arith.constant dense<0xFF800000> : vector<8xf32>
    %21 = vector.multi_reduction <maximumf>, %20, %cst_13 [1] : vector<8x8xf32> to vector<8xf32>
    %22 = vector.shape_cast %21 : vector<8xf32> to vector<8x1xf32>
    %23 = vector.broadcast %22 : vector<8x1xf32> to vector<8x8xf32>
    %24 = arith.subf %20, %23 : vector<8x8xf32>
    %25 = math.exp %24 : vector<8x8xf32>
    %cst_14 = arith.constant dense<0.000000e+00> : vector<8xf32>
    %26 = vector.multi_reduction <add>, %25, %cst_14 [1] : vector<8x8xf32> to vector<8xf32>
    %27 = vector.shape_cast %26 : vector<8xf32> to vector<8x1xf32>
    %28 = vector.broadcast %27 : vector<8x1xf32> to vector<8x8xf32>
    %29 = arith.divf %25, %28 : vector<8x8xf32>
    %cst_15 = arith.constant dense<0.000000e+00> : vector<8x8xf32>
    %30 = tpu.matmul %29, %19, %cst_15 {dimension_numbers = #tpu.dot_dimension_numbers<[1], [0], [0], [1], [0, 0, 1, 1], [], []>} : vector<8x8xf32>, vector<8x8xf32>, vector<8x8xf32> -> vector<8x8xf32>
    %31 = vector.extract_strided_slice %12 {offsets = [0, 0], sizes = [8, 32], strides = [1, 1]} : vector<32x32xf32> to vector<8x32xf32>
    %cst_16 = arith.constant dense<0.000000e+00> : vector<8x32xf32>
    %32 = tpu.matmul %30, %31, %cst_16 {dimension_numbers = #tpu.dot_dimension_numbers<[1], [0], [0], [1], [0, 0, 1, 1], [], []>} : vector<8x8xf32>, vector<8x32xf32>, vector<8x32xf32> -> vector<8x32xf32>
    %33 = arith.addf %16, %32 : vector<8x32xf32>
    %34 = vector.extract_strided_slice %9 {offsets = [0, 8], sizes = [8, 8], strides = [1, 1]} : vector<8x32xf32> to vector<8x8xf32>
    %35 = vector.extract_strided_slice %10 {offsets = [0, 8], sizes = [8, 8], strides = [1, 1]} : vector<8x32xf32> to vector<8x8xf32>
    %36 = vector.extract_strided_slice %11 {offsets = [0, 8], sizes = [8, 8], strides = [1, 1]} : vector<8x32xf32> to vector<8x8xf32>
    "tpu.trace_start"() <{level = 10 : i32, message = "qd,kd->qk"}> : () -> ()
    %cst_17 = arith.constant dense<0.000000e+00> : vector<8x8xf32>
    %37 = tpu.matmul %34, %35, %cst_17 {dimension_numbers = #tpu.dot_dimension_numbers<[1], [1], [0], [0], [0, 0, 1, 0], [], []>} : vector<8x8xf32>, vector<8x8xf32>, vector<8x8xf32> -> vector<8x8xf32>
    "tpu.trace_stop"() : () -> ()
    %cst_18 = arith.constant dense<0xFF800000> : vector<8xf32>
    %38 = vector.multi_reduction <maximumf>, %37, %cst_18 [1] : vector<8x8xf32> to vector<8xf32>
    %39 = vector.shape_cast %38 : vector<8xf32> to vector<8x1xf32>
    %40 = vector.broadcast %39 : vector<8x1xf32> to vector<8x8xf32>
    %41 = arith.subf %37, %40 : vector<8x8xf32>
    %42 = math.exp %41 : vector<8x8xf32>
    %cst_19 = arith.constant dense<0.000000e+00> : vector<8xf32>
    %43 = vector.multi_reduction <add>, %42, %cst_19 [1] : vector<8x8xf32> to vector<8xf32>
    %44 = vector.shape_cast %43 : vector<8xf32> to vector<8x1xf32>
    %45 = vector.broadcast %44 : vector<8x1xf32> to vector<8x8xf32>
    %46 = arith.divf %42, %45 : vector<8x8xf32>
    %cst_20 = arith.constant dense<0.000000e+00> : vector<8x8xf32>
    %47 = tpu.matmul %46, %36, %cst_20 {dimension_numbers = #tpu.dot_dimension_numbers<[1], [0], [0], [1], [0, 0, 1, 1], [], []>} : vector<8x8xf32>, vector<8x8xf32>, vector<8x8xf32> -> vector<8x8xf32>
    %48 = vector.extract_strided_slice %12 {offsets = [8, 0], sizes = [8, 32], strides = [1, 1]} : vector<32x32xf32> to vector<8x32xf32>
    %cst_21 = arith.constant dense<0.000000e+00> : vector<8x32xf32>
    %49 = tpu.matmul %47, %48, %cst_21 {dimension_numbers = #tpu.dot_dimension_numbers<[1], [0], [0], [1], [0, 0, 1, 1], [], []>} : vector<8x8xf32>, vector<8x32xf32>, vector<8x32xf32> -> vector<8x32xf32>
    %50 = arith.addf %33, %49 : vector<8x32xf32>
    %51 = vector.extract_strided_slice %9 {offsets = [0, 16], sizes = [8, 8], strides = [1, 1]} : vector<8x32xf32> to vector<8x8xf32>
    %52 = vector.extract_strided_slice %10 {offsets = [0, 16], sizes = [8, 8], strides = [1, 1]} : vector<8x32xf32> to vector<8x8xf32>
    %53 = vector.extract_strided_slice %11 {offsets = [0, 16], sizes = [8, 8], strides = [1, 1]} : vector<8x32xf32> to vector<8x8xf32>
    "tpu.trace_start"() <{level = 10 : i32, message = "qd,kd->qk"}> : () -> ()
    %cst_22 = arith.constant dense<0.000000e+00> : vector<8x8xf32>
    %54 = tpu.matmul %51, %52, %cst_22 {dimension_numbers = #tpu.dot_dimension_numbers<[1], [1], [0], [0], [0, 0, 1, 0], [], []>} : vector<8x8xf32>, vector<8x8xf32>, vector<8x8xf32> -> vector<8x8xf32>
    "tpu.trace_stop"() : () -> ()
    %cst_23 = arith.constant dense<0xFF800000> : vector<8xf32>
    %55 = vector.multi_reduction <maximumf>, %54, %cst_23 [1] : vector<8x8xf32> to vector<8xf32>
    %56 = vector.shape_cast %55 : vector<8xf32> to vector<8x1xf32>
    %57 = vector.broadcast %56 : vector<8x1xf32> to vector<8x8xf32>
    %58 = arith.subf %54, %57 : vector<8x8xf32>
    %59 = math.exp %58 : vector<8x8xf32>
    %cst_24 = arith.constant dense<0.000000e+00> : vector<8xf32>
    %60 = vector.multi_reduction <add>, %59, %cst_24 [1] : vector<8x8xf32> to vector<8xf32>
    %61 = vector.shape_cast %60 : vector<8xf32> to vector<8x1xf32>
    %62 = vector.broadcast %61 : vector<8x1xf32> to vector<8x8xf32>
    %63 = arith.divf %59, %62 : vector<8x8xf32>
    %cst_25 = arith.constant dense<0.000000e+00> : vector<8x8xf32>
    %64 = tpu.matmul %63, %53, %cst_25 {dimension_numbers = #tpu.dot_dimension_numbers<[1], [0], [0], [1], [0, 0, 1, 1], [], []>} : vector<8x8xf32>, vector<8x8xf32>, vector<8x8xf32> -> vector<8x8xf32>
    %65 = vector.extract_strided_slice %12 {offsets = [16, 0], sizes = [8, 32], strides = [1, 1]} : vector<32x32xf32> to vector<8x32xf32>
    %cst_26 = arith.constant dense<0.000000e+00> : vector<8x32xf32>
    %66 = tpu.matmul %64, %65, %cst_26 {dimension_numbers = #tpu.dot_dimension_numbers<[1], [0], [0], [1], [0, 0, 1, 1], [], []>} : vector<8x8xf32>, vector<8x32xf32>, vector<8x32xf32> -> vector<8x32xf32>
    %67 = arith.addf %50, %66 : vector<8x32xf32>
    %68 = vector.extract_strided_slice %9 {offsets = [0, 24], sizes = [8, 8], strides = [1, 1]} : vector<8x32xf32> to vector<8x8xf32>
    %69 = vector.extract_strided_slice %10 {offsets = [0, 24], sizes = [8, 8], strides = [1, 1]} : vector<8x32xf32> to vector<8x8xf32>
    %70 = vector.extract_strided_slice %11 {offsets = [0, 24], sizes = [8, 8], strides = [1, 1]} : vector<8x32xf32> to vector<8x8xf32>
    "tpu.trace_start"() <{level = 10 : i32, message = "qd,kd->qk"}> : () -> ()
    %cst_27 = arith.constant dense<0.000000e+00> : vector<8x8xf32>
    %71 = tpu.matmul %68, %69, %cst_27 {dimension_numbers = #tpu.dot_dimension_numbers<[1], [1], [0], [0], [0, 0, 1, 0], [], []>} : vector<8x8xf32>, vector<8x8xf32>, vector<8x8xf32> -> vector<8x8xf32>
    "tpu.trace_stop"() : () -> ()
    %cst_28 = arith.constant dense<0xFF800000> : vector<8xf32>
    %72 = vector.multi_reduction <maximumf>, %71, %cst_28 [1] : vector<8x8xf32> to vector<8xf32>
    %73 = vector.shape_cast %72 : vector<8xf32> to vector<8x1xf32>
    %74 = vector.broadcast %73 : vector<8x1xf32> to vector<8x8xf32>
    %75 = arith.subf %71, %74 : vector<8x8xf32>
    %76 = math.exp %75 : vector<8x8xf32>
    %cst_29 = arith.constant dense<0.000000e+00> : vector<8xf32>
    %77 = vector.multi_reduction <add>, %76, %cst_29 [1] : vector<8x8xf32> to vector<8xf32>
    %78 = vector.shape_cast %77 : vector<8xf32> to vector<8x1xf32>
    %79 = vector.broadcast %78 : vector<8x1xf32> to vector<8x8xf32>
    %80 = arith.divf %76, %79 : vector<8x8xf32>
    %cst_30 = arith.constant dense<0.000000e+00> : vector<8x8xf32>
    %81 = tpu.matmul %80, %70, %cst_30 {dimension_numbers = #tpu.dot_dimension_numbers<[1], [0], [0], [1], [0, 0, 1, 1], [], []>} : vector<8x8xf32>, vector<8x8xf32>, vector<8x8xf32> -> vector<8x8xf32>
    %82 = vector.extract_strided_slice %12 {offsets = [24, 0], sizes = [8, 32], strides = [1, 1]} : vector<32x32xf32> to vector<8x32xf32>
    %cst_31 = arith.constant dense<0.000000e+00> : vector<8x32xf32>
    %83 = tpu.matmul %81, %82, %cst_31 {dimension_numbers = #tpu.dot_dimension_numbers<[1], [0], [0], [1], [0, 0, 1, 1], [], []>} : vector<8x8xf32>, vector<8x32xf32>, vector<8x32xf32> -> vector<8x32xf32>
    %84 = arith.addf %67, %83 : vector<8x32xf32>
    %85 = arith.addf %1, %84 : vector<8x32xf32>
    %cst_32 = arith.constant dense<0.000000e+00> : vector<8xf32>
    %86 = vector.multi_reduction <add>, %85, %cst_32 [1] : vector<8x32xf32> to vector<8xf32>
    %87 = vector.shape_cast %86 : vector<8xf32> to vector<8x1xf32>
    %cst_33 = arith.constant 3.200000e+01 : f32
    %88 = vector.broadcast %cst_33 : f32 to vector<8x1xf32>
    %89 = arith.divf %87, %88 : vector<8x1xf32>
    %90 = vector.broadcast %89 : vector<8x1xf32> to vector<8x32xf32>
    %91 = arith.subf %85, %90 : vector<8x32xf32>
    %92 = arith.mulf %91, %91 : vector<8x32xf32>
    %cst_34 = arith.constant dense<0.000000e+00> : vector<8xf32>
    %93 = vector.multi_reduction <add>, %92, %cst_34 [1] : vector<8x32xf32> to vector<8xf32>
    %94 = vector.shape_cast %93 : vector<8xf32> to vector<8x1xf32>
    %cst_35 = arith.constant 3.200000e+01 : f32
    %95 = vector.broadcast %cst_35 : f32 to vector<8x1xf32>
    %96 = arith.divf %94, %95 : vector<8x1xf32>
    %97 = vector.broadcast %89 : vector<8x1xf32> to vector<8x32xf32>
    %98 = arith.subf %85, %97 : vector<8x32xf32>
    %cst_36 = arith.constant 9.99999974E-6 : f32
    %99 = vector.broadcast %cst_36 : f32 to vector<8x1xf32>
    %100 = arith.addf %96, %99 : vector<8x1xf32>
    %101 = math.rsqrt %100 : vector<8x1xf32>
    %102 = vector.broadcast %101 : vector<8x1xf32> to vector<8x32xf32>
    %103 = arith.mulf %98, %102 : vector<8x32xf32>
    %c0_37 = arith.constant 0 : index
    %c0_38 = arith.constant 0 : index
    %104 = vector.load %arg6[%c0_37, %c0_38] : memref<1x32xf32, #tpu.memory_space<vmem>>, vector<1x32xf32>
    %105 = vector.broadcast %104 : vector<1x32xf32> to vector<8x32xf32>
    %106 = arith.mulf %103, %105 : vector<8x32xf32>
    %c0_39 = arith.constant 0 : index
    %c0_40 = arith.constant 0 : index
    %107 = vector.load %arg7[%c0_39, %c0_40] : memref<1x32xf32, #tpu.memory_space<vmem>>, vector<1x32xf32>
    %108 = vector.broadcast %107 : vector<1x32xf32> to vector<8x32xf32>
    %109 = arith.addf %106, %108 : vector<8x32xf32>
    %c0_41 = arith.constant 0 : index
    %c0_42 = arith.constant 0 : index
    %110 = vector.load %arg8[%c0_41, %c0_42] : memref<32x64xf32, #tpu.memory_space<vmem>>, vector<32x64xf32>
    %cst_43 = arith.constant dense<0.000000e+00> : vector<8x64xf32>
    %111 = tpu.matmul %109, %110, %cst_43 {dimension_numbers = #tpu.dot_dimension_numbers<[1], [0], [0], [1], [0, 0, 1, 1], [], []>} : vector<8x32xf32>, vector<32x64xf32>, vector<8x64xf32> -> vector<8x64xf32>
    %c0_44 = arith.constant 0 : index
    %c0_45 = arith.constant 0 : index
    %112 = vector.load %arg9[%c0_44, %c0_45] : memref<1x64xf32, #tpu.memory_space<vmem>>, vector<1x64xf32>
    %113 = vector.broadcast %112 : vector<1x64xf32> to vector<8x64xf32>
    %114 = arith.addf %111, %113 : vector<8x64xf32>
    %cst_46 = arith.constant 0.000000e+00 : f32
    %115 = vector.broadcast %cst_46 : f32 to vector<8x64xf32>
    %116 = arith.maximumf %114, %115 : vector<8x64xf32>
    %c0_47 = arith.constant 0 : index
    %c0_48 = arith.constant 0 : index
    %117 = vector.load %arg10[%c0_47, %c0_48] : memref<64x32xf32, #tpu.memory_space<vmem>>, vector<64x32xf32>
    %cst_49 = arith.constant dense<0.000000e+00> : vector<8x32xf32>
    %118 = tpu.matmul %116, %117, %cst_49 {dimension_numbers = #tpu.dot_dimension_numbers<[1], [0], [0], [1], [0, 0, 1, 1], [], []>} : vector<8x64xf32>, vector<64x32xf32>, vector<8x32xf32> -> vector<8x32xf32>
    %c0_50 = arith.constant 0 : index
    %c0_51 = arith.constant 0 : index
    %119 = vector.load %arg11[%c0_50, %c0_51] : memref<1x32xf32, #tpu.memory_space<vmem>>, vector<1x32xf32>
    %120 = vector.broadcast %119 : vector<1x32xf32> to vector<8x32xf32>
    %121 = arith.addf %118, %120 : vector<8x32xf32>
    %122 = arith.addf %109, %121 : vector<8x32xf32>
    %cst_52 = arith.constant dense<0.000000e+00> : vector<8xf32>
    %123 = vector.multi_reduction <add>, %122, %cst_52 [1] : vector<8x32xf32> to vector<8xf32>
    %124 = vector.shape_cast %123 : vector<8xf32> to vector<8x1xf32>
    %cst_53 = arith.constant 3.200000e+01 : f32
    %125 = vector.broadcast %cst_53 : f32 to vector<8x1xf32>
    %126 = arith.divf %124, %125 : vector<8x1xf32>
    %127 = vector.broadcast %126 : vector<8x1xf32> to vector<8x32xf32>
    %128 = arith.subf %122, %127 : vector<8x32xf32>
    %129 = arith.mulf %128, %128 : vector<8x32xf32>
    %cst_54 = arith.constant dense<0.000000e+00> : vector<8xf32>
    %130 = vector.multi_reduction <add>, %129, %cst_54 [1] : vector<8x32xf32> to vector<8xf32>
    %131 = vector.shape_cast %130 : vector<8xf32> to vector<8x1xf32>
    %cst_55 = arith.constant 3.200000e+01 : f32
    %132 = vector.broadcast %cst_55 : f32 to vector<8x1xf32>
    %133 = arith.divf %131, %132 : vector<8x1xf32>
    %134 = vector.broadcast %126 : vector<8x1xf32> to vector<8x32xf32>
    %135 = arith.subf %122, %134 : vector<8x32xf32>
    %cst_56 = arith.constant 9.99999974E-6 : f32
    %136 = vector.broadcast %cst_56 : f32 to vector<8x1xf32>
    %137 = arith.addf %133, %136 : vector<8x1xf32>
    %138 = math.rsqrt %137 : vector<8x1xf32>
    %139 = vector.broadcast %138 : vector<8x1xf32> to vector<8x32xf32>
    %140 = arith.mulf %135, %139 : vector<8x32xf32>
    %c0_57 = arith.constant 0 : index
    %c0_58 = arith.constant 0 : index
    %141 = vector.load %arg12[%c0_57, %c0_58] : memref<1x32xf32, #tpu.memory_space<vmem>>, vector<1x32xf32>
    %142 = vector.broadcast %141 : vector<1x32xf32> to vector<8x32xf32>
    %143 = arith.mulf %140, %142 : vector<8x32xf32>
    %c0_59 = arith.constant 0 : index
    %c0_60 = arith.constant 0 : index
    %144 = vector.load %arg13[%c0_59, %c0_60] : memref<1x32xf32, #tpu.memory_space<vmem>>, vector<1x32xf32>
    %145 = vector.broadcast %144 : vector<1x32xf32> to vector<8x32xf32>
    %146 = arith.addf %143, %145 : vector<8x32xf32>
    %cst_61 = arith.constant 0.000000e+00 : f32
    %147 = vector.broadcast %cst_61 : f32 to vector<10x32xf32>
    %c0_62 = arith.constant 0 : index
    %c0_63 = arith.constant 0 : index
    %148 = vector.load %arg17[%c0_62, %c0_63] : memref<10x32xf32, #tpu.memory_space<vmem>>, vector<10x32xf32>
    tpu.vector_store %arg17[%c0_62, %c0_63], %147 {strides = array<i32>} : memref<10x32xf32, #tpu.memory_space<vmem>>, vector<10x32xf32>,
    %c1 = arith.constant 1 : index
    %c0_64 = arith.constant 0 : index
    %149 = vector.load %arg17[%c1, %c0_64] : memref<10x32xf32, #tpu.memory_space<vmem>>, vector<8x32xf32>
    tpu.vector_store %arg17[%c1, %c0_64], %146 {strides = array<i32>} : memref<10x32xf32, #tpu.memory_space<vmem>>, vector<8x32xf32>,
    %cst_65 = arith.constant 0.000000e+00 : f32
    %150 = vector.broadcast %cst_65 : f32 to vector<8x32xf32>
    %c0_66 = arith.constant 0 : index
    %c0_67 = arith.constant 0 : index
    %151 = vector.load %arg15[%c0_66, %c0_67] : memref<1x32xf32, #tpu.memory_space<vmem>>, vector<1x32xf32>
    %152 = vector.broadcast %151 : vector<1x32xf32> to vector<8x32xf32>
    %153 = arith.addf %150, %152 : vector<8x32xf32>
    %c0_68 = arith.constant 0 : index
    %c0_69 = arith.constant 0 : index
    %154 = vector.load %arg17[%c0_68, %c0_69] : memref<10x32xf32, #tpu.memory_space<vmem>>, vector<8x32xf32>
    %c0_70 = arith.constant 0 : index
    %c0_71 = arith.constant 0 : index
    %c0_72 = arith.constant 0 : index
    %155 = vector.load %arg14[%c0_70, %c0_71, %c0_72] : memref<3x32x32xf32, #tpu.memory_space<vmem>>, vector<1x32x32xf32>
    %156 = vector.shape_cast %155 : vector<1x32x32xf32> to vector<32x32xf32>
    %cst_73 = arith.constant dense<0.000000e+00> : vector<8x32xf32>
    %157 = tpu.matmul %154, %156, %cst_73 {dimension_numbers = #tpu.dot_dimension_numbers<[1], [0], [0], [1], [0, 0, 1, 1], [], []>} : vector<8x32xf32>, vector<32x32xf32>, vector<8x32xf32> -> vector<8x32xf32>
    %158 = arith.addf %153, %157 : vector<8x32xf32>
    %c1_74 = arith.constant 1 : index
    %c0_75 = arith.constant 0 : index
    %159 = vector.load %arg17[%c1_74, %c0_75] : memref<10x32xf32, #tpu.memory_space<vmem>>, vector<8x32xf32>
    %c1_76 = arith.constant 1 : index
    %c0_77 = arith.constant 0 : index
    %c0_78 = arith.constant 0 : index
    %160 = vector.load %arg14[%c1_76, %c0_77, %c0_78] : memref<3x32x32xf32, #tpu.memory_space<vmem>>, vector<1x32x32xf32>
    %161 = vector.shape_cast %160 : vector<1x32x32xf32> to vector<32x32xf32>
    %cst_79 = arith.constant dense<0.000000e+00> : vector<8x32xf32>
    %162 = tpu.matmul %159, %161, %cst_79 {dimension_numbers = #tpu.dot_dimension_numbers<[1], [0], [0], [1], [0, 0, 1, 1], [], []>} : vector<8x32xf32>, vector<32x32xf32>, vector<8x32xf32> -> vector<8x32xf32>
    %163 = arith.addf %158, %162 : vector<8x32xf32>
    %c2 = arith.constant 2 : index
    %c0_80 = arith.constant 0 : index
    %164 = vector.load %arg17[%c2, %c0_80] : memref<10x32xf32, #tpu.memory_space<vmem>>, vector<8x32xf32>
    %c2_81 = arith.constant 2 : index
    %c0_82 = arith.constant 0 : index
    %c0_83 = arith.constant 0 : index
    %165 = vector.load %arg14[%c2_81, %c0_82, %c0_83] : memref<3x32x32xf32, #tpu.memory_space<vmem>>, vector<1x32x32xf32>
    %166 = vector.shape_cast %165 : vector<1x32x32xf32> to vector<32x32xf32>
    %cst_84 = arith.constant dense<0.000000e+00> : vector<8x32xf32>
    %167 = tpu.matmul %164, %166, %cst_84 {dimension_numbers = #tpu.dot_dimension_numbers<[1], [0], [0], [1], [0, 0, 1, 1], [], []>} : vector<8x32xf32>, vector<32x32xf32>, vector<8x32xf32> -> vector<8x32xf32>
    %168 = arith.addf %163, %167 : vector<8x32xf32>
    %cst_85 = arith.constant 0.000000e+00 : f32
    %169 = vector.broadcast %cst_85 : f32 to vector<8x32xf32>
    %170 = arith.maximumf %168, %169 : vector<8x32xf32>
    %c0_86 = arith.constant 0 : index
    %c0_87 = arith.constant 0 : index
    %c0_88 = arith.constant 0 : index
    %171 = vector.load %arg16[%c0_86, %c0_87, %c0_88] : memref<1x8x32xf32, #tpu.memory_space<vmem>>, vector<1x8x32xf32>
    %172 = vector.shape_cast %171 : vector<1x8x32xf32> to vector<8x32xf32>
    %173 = vector.shape_cast %170 : vector<8x32xf32> to vector<1x8x32xf32>
    tpu.vector_store %arg16[%c0_86, %c0_87, %c0_88], %173 {strides = array<i32>} : memref<1x8x32xf32, #tpu.memory_space<vmem>>, vector<1x8x32xf32>,
    return
  }
  func.func @transform_0(%arg0: i32) -> (i32, i32, i32) {
    %c0_i32 = arith.constant 0 : i32
    %c0_i32_0 = arith.constant 0 : i32
    %c0_i32_1 = arith.constant 0 : i32
    return %arg0, %c0_i32, %c0_i32_0 : i32, i32, i32
  }
  func.func @transform_1(%arg0: i32) -> (i32, i32) {
    %c0_i32 = arith.constant 0 : i32
    %c0_i32_0 = arith.constant 0 : i32
    %c0_i32_1 = arith.constant 0 : i32
    return %c0_i32, %c0_i32_0 : i32, i32
  }
  func.func @transform_2(%arg0: i32) -> (i32, i32) {
    %c0_i32 = arith.constant 0 : i32
    %c0_i32_0 = arith.constant 0 : i32
    %c0_i32_1 = arith.constant 0 : i32
    return %c0_i32, %c0_i32_0 : i32, i32
  }
  func.func @transform_3(%arg0: i32) -> (i32, i32) {
    %c0_i32 = arith.constant 0 : i32
    %c0_i32_0 = arith.constant 0 : i32
    %c0_i32_1 = arith.constant 0 : i32
    return %c0_i32, %c0_i32_0 : i32, i32
  }
  func.func @transform_4(%arg0: i32) -> (i32, i32) {
    %c0_i32 = arith.constant 0 : i32
    %c0_i32_0 = arith.constant 0 : i32
    %c0_i32_1 = arith.constant 0 : i32
    return %c0_i32, %c0_i32_0 : i32, i32
  }
  func.func @transform_5(%arg0: i32) -> (i32, i32) {
    %c0_i32 = arith.constant 0 : i32
    %c0_i32_0 = arith.constant 0 : i32
    %c0_i32_1 = arith.constant 0 : i32
    return %c0_i32, %c0_i32_0 : i32, i32
  }
  func.func @transform_6(%arg0: i32) -> (i32, i32) {
    %c0_i32 = arith.constant 0 : i32
    %c0_i32_0 = arith.constant 0 : i32
    %c0_i32_1 = arith.constant 0 : i32
    return %c0_i32, %c0_i32_0 : i32, i32
  }
  func.func @transform_7(%arg0: i32) -> (i32, i32) {
    %c0_i32 = arith.constant 0 : i32
    %c0_i32_0 = arith.constant 0 : i32
    %c0_i32_1 = arith.constant 0 : i32
    return %c0_i32, %c0_i32_0 : i32, i32
  }
  func.func @transform_8(%arg0: i32) -> (i32, i32) {
    %c0_i32 = arith.constant 0 : i32
    %c0_i32_0 = arith.constant 0 : i32
    %c0_i32_1 = arith.constant 0 : i32
    return %c0_i32, %c0_i32_0 : i32, i32
  }
  func.func @transform_9(%arg0: i32) -> (i32, i32) {
    %c0_i32 = arith.constant 0 : i32
    %c0_i32_0 = arith.constant 0 : i32
    %c0_i32_1 = arith.constant 0 : i32
    return %c0_i32, %c0_i32_0 : i32, i32
  }
  func.func @transform_10(%arg0: i32) -> (i32, i32) {
    %c0_i32 = arith.constant 0 : i32
    %c0_i32_0 = arith.constant 0 : i32
    %c0_i32_1 = arith.constant 0 : i32
    return %c0_i32, %c0_i32_0 : i32, i32
  }
  func.func @transform_11(%arg0: i32) -> (i32, i32) {
    %c0_i32 = arith.constant 0 : i32
    %c0_i32_0 = arith.constant 0 : i32
    %c0_i32_1 = arith.constant 0 : i32
    return %c0_i32, %c0_i32_0 : i32, i32
  }
  func.func @transform_12(%arg0: i32) -> (i32, i32) {
    %c0_i32 = arith.constant 0 : i32
    %c0_i32_0 = arith.constant 0 : i32
    %c0_i32_1 = arith.constant 0 : i32
    return %c0_i32, %c0_i32_0 : i32, i32
  }
  func.func @transform_13(%arg0: i32) -> (i32, i32, i32) {
    %c0_i32 = arith.constant 0 : i32
    %c0_i32_0 = arith.constant 0 : i32
    %c0_i32_1 = arith.constant 0 : i32
    %c0_i32_2 = arith.constant 0 : i32
    return %c0_i32, %c0_i32_0, %c0_i32_1 : i32, i32, i32
  }
  func.func @transform_14(%arg0: i32) -> (i32, i32) {
    %c0_i32 = arith.constant 0 : i32
    %c0_i32_0 = arith.constant 0 : i32
    %c0_i32_1 = arith.constant 0 : i32
    return %c0_i32, %c0_i32_0 : i32, i32
  }
  func.func @transform_15(%arg0: i32) -> (i32, i32, i32) {
    %c0_i32 = arith.constant 0 : i32
    %c0_i32_0 = arith.constant 0 : i32
    %c0_i32_1 = arith.constant 0 : i32
    return %arg0, %c0_i32, %c0_i32_0 : i32, i32, i32
  }
}

</mosaic_0001>

<llo_original>
// kernel: transformer_encoder_conv1d_forward.1
$region0: #{transformer_encoder_conv1d_forward.1}
  #allocation0 [shape = 'u32[]', space=smem, size = 0x4, offset = 0x4, fixed_abs, tag = 'smem constant byte address 0x4 - core index']
  #allocation1 [shape = 'u32[144,128]{1,0:T(1,128)}', space=vmem, size = 0x12000, scoped, tag = 'internal scratch']
  #allocation2 [shape = 'f32[10,32]{1,0:T(8,128)}', space=vmem, size = 0x2000, scoped, tag = 'scratch operand']
  %s0 = inlined_call_operand.vmem [shape: f32[2,8,32], index: 0, kind: input, shape index: {}]
  %s1 = inlined_call_operand.vmem [shape: f32[32,96], index: 1, kind: input, shape index: {}]
  %s2 = inlined_call_operand.vmem [shape: f32[1,96], index: 2, kind: input, shape index: {}]
  %s3 = inlined_call_operand.hbm [shape: f32[32,32], index: 3, kind: input, shape index: {}]
  %s4 = inlined_call_operand.vmem [shape: f32[1,32], index: 4, kind: input, shape index: {}]
  %s5 = inlined_call_operand.vmem [shape: f32[1,32], index: 5, kind: input, shape index: {}]
  %s6 = inlined_call_operand.vmem [shape: f32[1,32], index: 6, kind: input, shape index: {}]
  %s7 = inlined_call_operand.hbm [shape: f32[32,64], index: 7, kind: input, shape index: {}]
  %s8 = inlined_call_operand.vmem [shape: f32[1,64], index: 8, kind: input, shape index: {}]
  %s9 = inlined_call_operand.vmem [shape: f32[64,32], index: 9, kind: input, shape index: {}]
  %s10 = inlined_call_operand.vmem [shape: f32[1,32], index: 10, kind: input, shape index: {}]
  %s11 = inlined_call_operand.vmem [shape: f32[1,32], index: 11, kind: input, shape index: {}]
  %s12 = inlined_call_operand.vmem [shape: f32[1,32], index: 12, kind: input, shape index: {}]
  %s13 = inlined_call_operand.vmem [shape: f32[3,32,32], index: 13, kind: input, shape index: {}]
  %s14 = inlined_call_operand.vmem [shape: f32[1,32], index: 14, kind: input, shape index: {}]
  %s15 = inlined_call_operand.vmem [shape: f32[2,8,32], index: 15, kind: output, shape index: {}]
  %s16 = sld [smem:[#allocation0]]
  $region101: #{transformer_encoder_conv1d_forward.1} parent=0
    _
  %s18 = ssub.s32 1, %s16
  %s19 = scalar_select 0, %s18, %s16
  $region1: #{transformer_encoder_conv1d_forward.1} parent=0
    #allocation3 [shape = 'u8[16384]{0}', space=vmem, size = 0x4000, scoped, tag = 'input window, operand 3, single buffered']
    #allocation4 [shape = 's32[2]{0}', space=sflag, size = 0x8, scoped, tag = 'scoped memory for transformer_encoder_conv1d_forward.1']
    #allocation5 [shape = 'u8[16384]{0}', space=vmem, size = 0x4000, scoped, tag = 'input window, operand 7, single buffered']
    #allocation6 [shape = 's32[1]{0}', space=sflag, size = 0x4, scoped, tag = 'scoped memory for transformer_encoder_conv1d_forward.1']
    %20 = vsyncpa [#allocation4], 0
    %21 = vsyncpa [#allocation6], 0
    loop: start=0, step=1, limit=4
    $region2: #{transformer_encoder_conv1d_forward.1} parent=1 // loop_pre_header
      _
    $region3: #{transformer_encoder_conv1d_forward.1} parent=1 // loop_header
      %s23 = sphi 0, %s27
      %p24 = scmp.ge.s32.totalorder %s23, 4
      %s33 = sphi 0, %s35
      %s36 = sphi 0, %s33
      %s37 = sphi 0, %s36
      %s53 = sphi 0, %s37
      %s57 = sphi 0, %s57
      %s59 = sphi 0, %s57
      %s60 = sphi 0, %s59
      %s74 = sphi 0, %s60
      %s78 = sphi 0, %s78
      %s80 = sphi 0, %s78
      %s81 = sphi 0, %s80
      %s95 = sphi 0, %s81
      %s99 = sphi 0, %s99
      %s101 = sphi 0, %s99
      %s102 = sphi 0, %s101
      %s116 = sphi 0, %s102
      %s120 = sphi 0, %s120
      %s122 = sphi 0, %s120
      %s123 = sphi 0, %s122
      %s137 = sphi 0, %s123
      %s141 = sphi 0, %s141
      %s143 = sphi 0, %s141
      %s144 = sphi 0, %s143
      %s158 = sphi 0, %s144
      %s162 = sphi 0, %s162
      %s164 = sphi 0, %s162
      %s165 = sphi 0, %s164
      %s179 = sphi 0, %s165
      %s183 = sphi 0, %s183
      %s185 = sphi 0, %s183
      %s186 = sphi 0, %s185
      %s200 = sphi 0, %s186
      %s204 = sphi 0, %s204
      %s206 = sphi 0, %s204
      %s207 = sphi 0, %s206
      %s221 = sphi 0, %s207
      %s225 = sphi 0, %s225
      %s227 = sphi 0, %s225
      %s228 = sphi 0, %s227
      %s242 = sphi 0, %s228
      %s246 = sphi 0, %s246
      %s248 = sphi 0, %s246
      %s249 = sphi 0, %s248
      %s263 = sphi 0, %s249
      %s267 = sphi 0, %s267
      %s269 = sphi 0, %s267
      %s270 = sphi 0, %s269
      %s284 = sphi 0, %s270
      %s288 = sphi 0, %s288
      %s290 = sphi 0, %s288
      %s291 = sphi 0, %s290
      %s305 = sphi 0, %s291
      %s309 = sphi 0, %s309
      %s311 = sphi 0, %s309
      %s312 = sphi 0, %s311
      %s326 = sphi 0, %s312
      %s330 = sphi 0, %s330
      %s332 = sphi 0, %s330
      %s333 = sphi 0, %s332
      %s347 = sphi 0, %s333
      %s353 = sphi 0, %s355
      %s356 = sphi 0, %s353
      %s357 = sphi 0, %s356
      %s373 = sphi 0, %s357
    $region4: #{transformer_encoder_conv1d_forward.1} parent=1 // loop_header_branch
      %26 = sbr.rel (%p24) target = $region8
    $region5: #{transformer_encoder_conv1d_forward.1} parent=1 // loop_body
      %s28 = ssub.s32 %s23, 1
      %s29 = ssub.s32 %s23, 2
      %s30 = sadd.s32 %s23, 1
      %s31 = ssub.s32 %s23, %s30
      %p32 = scmp.eq.s32.totalorder %s31, 0
      %s34 = sadd.s32 %s33, 1
      %s35 = scalar_select %p32, %s33, %s34
      %p38 = pneg %p32
      %p39 = scmp.eq.s32.totalorder %s23, 1
      %p40 = por %p38, %p39
      %p41 = scmp.ne.s32.totalorder %s33, %s36
      %p42 = scmp.eq.s32.totalorder %s23, 0
      %p43 = por %p41, %p42
      %p44 = scmp.ne.s32.totalorder %s33, %s36
      %p45 = scmp.eq.s32.totalorder %s28, 1
      %p46 = por %p44, %p45
      %p47 = scmp.ne.s32.totalorder %s36, %s37
      %p48 = scmp.eq.s32.totalorder %s28, 0
      %p49 = por %p47, %p48
      %p50 = scmp.ne.s32.totalorder %s36, %s37
      %p51 = scmp.eq.s32.totalorder %s29, 1
      %p52 = por %p50, %p51
      %p54 = scmp.ne.s32.totalorder %s37, %s53
      %p55 = scmp.eq.s32.totalorder %s29, 0
      %p56 = por %p54, %p55
      %s58 = sadd.s32 %s57, 1
      %p61 = scmp.eq.s32.totalorder %s23, 1
      %p62 = scmp.ne.s32.totalorder %s57, %s59
      %p63 = scmp.eq.s32.totalorder %s23, 0
      %p64 = por %p62, %p63
      %p65 = scmp.ne.s32.totalorder %s57, %s59
      %p66 = scmp.eq.s32.totalorder %s28, 1
      %p67 = por %p65, %p66
      %p68 = scmp.ne.s32.totalorder %s59, %s60
      %p69 = scmp.eq.s32.totalorder %s28, 0
      %p70 = por %p68, %p69
      %p71 = scmp.ne.s32.totalorder %s59, %s60
      %p72 = scmp.eq.s32.totalorder %s29, 1
      %p73 = por %p71, %p72
      %p75 = scmp.ne.s32.totalorder %s60, %s74
      %p76 = scmp.eq.s32.totalorder %s29, 0
      %p77 = por %p75, %p76
      %s79 = sadd.s32 %s78, 1
      %p82 = scmp.eq.s32.totalorder %s23, 1
      %p83 = scmp.ne.s32.totalorder %s78, %s80
      %p84 = scmp.eq.s32.totalorder %s23, 0
      %p85 = por %p83, %p84
      %p86 = scmp.ne.s32.totalorder %s78, %s80
      %p87 = scmp.eq.s32.totalorder %s28, 1
      %p88 = por %p86, %p87
      %p89 = scmp.ne.s32.totalorder %s80, %s81
      %p90 = scmp.eq.s32.totalorder %s28, 0
      %p91 = por %p89, %p90
      %p92 = scmp.ne.s32.totalorder %s80, %s81
      %p93 = scmp.eq.s32.totalorder %s29, 1
      %p94 = por %p92, %p93
      %p96 = scmp.ne.s32.totalorder %s81, %s95
      %p97 = scmp.eq.s32.totalorder %s29, 0
      %p98 = por %p96, %p97
      %s100 = sadd.s32 %s99, 1
      %p103 = scmp.eq.s32.totalorder %s23, 1
      %p104 = scmp.ne.s32.totalorder %s99, %s101
      %p105 = scmp.eq.s32.totalorder %s23, 0
      %p106 = por %p104, %p105
      %p107 = scmp.ne.s32.totalorder %s99, %s101
      %p108 = scmp.eq.s32.totalorder %s28, 1
      %p109 = por %p107, %p108
      %p110 = scmp.ne.s32.totalorder %s101, %s102
      %p111 = scmp.eq.s32.totalorder %s28, 0
      %p112 = por %p110, %p111
      %p113 = scmp.ne.s32.totalorder %s101, %s102
      %p114 = scmp.eq.s32.totalorder %s29, 1
      %p115 = por %p113, %p114
      %p117 = scmp.ne.s32.totalorder %s102, %s116
      %p118 = scmp.eq.s32.totalorder %s29, 0
      %p119 = por %p117, %p118
      %s121 = sadd.s32 %s120, 1
      %p124 = scmp.eq.s32.totalorder %s23, 1
      %p125 = scmp.ne.s32.totalorder %s120, %s122
      %p126 = scmp.eq.s32.totalorder %s23, 0
      %p127 = por %p125, %p126
      %p128 = scmp.ne.s32.totalorder %s120, %s122
      %p129 = scmp.eq.s32.totalorder %s28, 1
      %p130 = por %p128, %p129
      %p131 = scmp.ne.s32.totalorder %s122, %s123
      %p132 = scmp.eq.s32.totalorder %s28, 0
      %p133 = por %p131, %p132
      %p134 = scmp.ne.s32.totalorder %s122, %s123
      %p135 = scmp.eq.s32.totalorder %s29, 1
      %p136 = por %p134, %p135
      %p138 = scmp.ne.s32.totalorder %s123, %s137
      %p139 = scmp.eq.s32.totalorder %s29, 0
      %p140 = por %p138, %p139
      %s142 = sadd.s32 %s141, 1
      %p145 = scmp.eq.s32.totalorder %s23, 1
      %p146 = scmp.ne.s32.totalorder %s141, %s143
      %p147 = scmp.eq.s32.totalorder %s23, 0
      %p148 = por %p146, %p147
      %p149 = scmp.ne.s32.totalorder %s141, %s143
      %p150 = scmp.eq.s32.totalorder %s28, 1
      %p151 = por %p149, %p150
      %p152 = scmp.ne.s32.totalorder %s143, %s144
      %p153 = scmp.eq.s32.totalorder %s28, 0
      %p154 = por %p152, %p153
      %p155 = scmp.ne.s32.totalorder %s143, %s144
      %p156 = scmp.eq.s32.totalorder %s29, 1
      %p157 = por %p155, %p156
      %p159 = scmp.ne.s32.totalorder %s144, %s158
      %p160 = scmp.eq.s32.totalorder %s29, 0
      %p161 = por %p159, %p160
      %s163 = sadd.s32 %s162, 1
      %p166 = scmp.eq.s32.totalorder %s23, 1
      %p167 = scmp.ne.s32.totalorder %s162, %s164
      %p168 = scmp.eq.s32.totalorder %s23, 0
      %p169 = por %p167, %p168
      %p170 = scmp.ne.s32.totalorder %s162, %s164
      %p171 = scmp.eq.s32.totalorder %s28, 1
      %p172 = por %p170, %p171
      %p173 = scmp.ne.s32.totalorder %s164, %s165
      %p174 = scmp.eq.s32.totalorder %s28, 0
      %p175 = por %p173, %p174
      %p176 = scmp.ne.s32.totalorder %s164, %s165
      %p177 = scmp.eq.s32.totalorder %s29, 1
      %p178 = por %p176, %p177
      %p180 = scmp.ne.s32.totalorder %s165, %s179
      %p181 = scmp.eq.s32.totalorder %s29, 0
      %p182 = por %p180, %p181
      %s184 = sadd.s32 %s183, 1
      %p187 = scmp.eq.s32.totalorder %s23, 1
      %p188 = scmp.ne.s32.totalorder %s183, %s185
      %p189 = scmp.eq.s32.totalorder %s23, 0
      %p190 = por %p188, %p189
      %p191 = scmp.ne.s32.totalorder %s183, %s185
      %p192 = scmp.eq.s32.totalorder %s28, 1
      %p193 = por %p191, %p192
      %p194 = scmp.ne.s32.totalorder %s185, %s186
      %p195 = scmp.eq.s32.totalorder %s28, 0
      %p196 = por %p194, %p195
      %p197 = scmp.ne.s32.totalorder %s185, %s186
      %p198 = scmp.eq.s32.totalorder %s29, 1
      %p199 = por %p197, %p198
      %p201 = scmp.ne.s32.totalorder %s186, %s200
      %p202 = scmp.eq.s32.totalorder %s29, 0
      %p203 = por %p201, %p202
      %s205 = sadd.s32 %s204, 1
      %p208 = scmp.eq.s32.totalorder %s23, 1
      %p209 = scmp.ne.s32.totalorder %s204, %s206
      %p210 = scmp.eq.s32.totalorder %s23, 0
      %p211 = por %p209, %p210
      %p212 = scmp.ne.s32.totalorder %s204, %s206
      %p213 = scmp.eq.s32.totalorder %s28, 1
      %p214 = por %p212, %p213
      %p215 = scmp.ne.s32.totalorder %s206, %s207
      %p216 = scmp.eq.s32.totalorder %s28, 0
      %p217 = por %p215, %p216
      %p218 = scmp.ne.s32.totalorder %s206, %s207
      %p219 = scmp.eq.s32.totalorder %s29, 1
      %p220 = por %p218, %p219
      %p222 = scmp.ne.s32.totalorder %s207, %s221
      %p223 = scmp.eq.s32.totalorder %s29, 0
      %p224 = por %p222, %p223
      %s226 = sadd.s32 %s225, 1
      %p229 = scmp.eq.s32.totalorder %s23, 1
      %p230 = scmp.ne.s32.totalorder %s225, %s227
      %p231 = scmp.eq.s32.totalorder %s23, 0
      %p232 = por %p230, %p231
      %p233 = scmp.ne.s32.totalorder %s225, %s227
      %p234 = scmp.eq.s32.totalorder %s28, 1
      %p235 = por %p233, %p234
      %p236 = scmp.ne.s32.totalorder %s227, %s228
      %p237 = scmp.eq.s32.totalorder %s28, 0
      %p238 = por %p236, %p237
      %p239 = scmp.ne.s32.totalorder %s227, %s228
      %p240 = scmp.eq.s32.totalorder %s29, 1
      %p241 = por %p239, %p240
      %p243 = scmp.ne.s32.totalorder %s228, %s242
      %p244 = scmp.eq.s32.totalorder %s29, 0
      %p245 = por %p243, %p244
      %s247 = sadd.s32 %s246, 1
      %p250 = scmp.eq.s32.totalorder %s23, 1
      %p251 = scmp.ne.s32.totalorder %s246, %s248
      %p252 = scmp.eq.s32.totalorder %s23, 0
      %p253 = por %p251, %p252
      %p254 = scmp.ne.s32.totalorder %s246, %s248
      %p255 = scmp.eq.s32.totalorder %s28, 1
      %p256 = por %p254, %p255
      %p257 = scmp.ne.s32.totalorder %s248, %s249
      %p258 = scmp.eq.s32.totalorder %s28, 0
      %p259 = por %p257, %p258
      %p260 = scmp.ne.s32.totalorder %s248, %s249
      %p261 = scmp.eq.s32.totalorder %s29, 1
      %p262 = por %p260, %p261
      %p264 = scmp.ne.s32.totalorder %s249, %s263
      %p265 = scmp.eq.s32.totalorder %s29, 0
      %p266 = por %p264, %p265
      %s268 = sadd.s32 %s267, 1
      %p271 = scmp.eq.s32.totalorder %s23, 1
      %p272 = scmp.ne.s32.totalorder %s267, %s269
      %p273 = scmp.eq.s32.totalorder %s23, 0
      %p274 = por %p272, %p273
      %p275 = scmp.ne.s32.totalorder %s267, %s269
      %p276 = scmp.eq.s32.totalorder %s28, 1
      %p277 = por %p275, %p276
      %p278 = scmp.ne.s32.totalorder %s269, %s270
      %p279 = scmp.eq.s32.totalorder %s28, 0
      %p280 = por %p278, %p279
      %p281 = scmp.ne.s32.totalorder %s269, %s270
      %p282 = scmp.eq.s32.totalorder %s29, 1
      %p283 = por %p281, %p282
      %p285 = scmp.ne.s32.totalorder %s270, %s284
      %p286 = scmp.eq.s32.totalorder %s29, 0
      %p287 = por %p285, %p286
      %s289 = sadd.s32 %s288, 1
      %p292 = scmp.eq.s32.totalorder %s23, 1
      %p293 = scmp.ne.s32.totalorder %s288, %s290
      %p294 = scmp.eq.s32.totalorder %s23, 0
      %p295 = por %p293, %p294
      %p296 = scmp.ne.s32.totalorder %s288, %s290
      %p297 = scmp.eq.s32.totalorder %s28, 1
      %p298 = por %p296, %p297
      %p299 = scmp.ne.s32.totalorder %s290, %s291
      %p300 = scmp.eq.s32.totalorder %s28, 0
      %p301 = por %p299, %p300
      %p302 = scmp.ne.s32.totalorder %s290, %s291
      %p303 = scmp.eq.s32.totalorder %s29, 1
      %p304 = por %p302, %p303
      %p306 = scmp.ne.s32.totalorder %s291, %s305
      %p307 = scmp.eq.s32.totalorder %s29, 0
      %p308 = por %p306, %p307
      %s310 = sadd.s32 %s309, 1
      %p313 = scmp.eq.s32.totalorder %s23, 1
      %p314 = scmp.ne.s32.totalorder %s309, %s311
      %p315 = scmp.eq.s32.totalorder %s23, 0
      %p316 = por %p314, %p315
      %p317 = scmp.ne.s32.totalorder %s309, %s311
      %p318 = scmp.eq.s32.totalorder %s28, 1
      %p319 = por %p317, %p318
      %p320 = scmp.ne.s32.totalorder %s311, %s312
      %p321 = scmp.eq.s32.totalorder %s28, 0
      %p322 = por %p320, %p321
      %p323 = scmp.ne.s32.totalorder %s311, %s312
      %p324 = scmp.eq.s32.totalorder %s29, 1
      %p325 = por %p323, %p324
      %p327 = scmp.ne.s32.totalorder %s312, %s326
      %p328 = scmp.eq.s32.totalorder %s29, 0
      %p329 = por %p327, %p328
      %s331 = sadd.s32 %s330, 1
      %p334 = scmp.eq.s32.totalorder %s23, 1
      %p335 = scmp.ne.s32.totalorder %s330, %s332
      %p336 = scmp.eq.s32.totalorder %s23, 0
      %p337 = por %p335, %p336
      %p338 = scmp.ne.s32.totalorder %s330, %s332
      %p339 = scmp.eq.s32.totalorder %s28, 1
      %p340 = por %p338, %p339
      %p341 = scmp.ne.s32.totalorder %s332, %s333
      %p342 = scmp.eq.s32.totalorder %s28, 0
      %p343 = por %p341, %p342
      %p344 = scmp.ne.s32.totalorder %s332, %s333
      %p345 = scmp.eq.s32.totalorder %s29, 1
      %p346 = por %p344, %p345
      %p348 = scmp.ne.s32.totalorder %s333, %s347
      %p349 = scmp.eq.s32.totalorder %s29, 0
      %p350 = por %p348, %p349
      %s351 = ssub.s32 %s23, %s30
      %p352 = scmp.eq.s32.totalorder %s351, 0
      %s354 = sadd.s32 %s353, 1
      %s355 = scalar_select %p352, %s353, %s354
      %p358 = pneg %p352
      %p359 = scmp.eq.s32.totalorder %s23, 1
      %p360 = por %p358, %p359
      %p361 = scmp.ne.s32.totalorder %s353, %s356
      %p362 = scmp.eq.s32.totalorder %s23, 0
      %p363 = por %p361, %p362
      %p364 = scmp.ne.s32.totalorder %s353, %s356
      %p365 = scmp.eq.s32.totalorder %s28, 1
      %p366 = por %p364, %p365
      %p367 = scmp.ne.s32.totalorder %s356, %s357
      %p368 = scmp.eq.s32.totalorder %s28, 0
      %p369 = por %p367, %p368
      %p370 = scmp.ne.s32.totalorder %s356, %s357
      %p371 = scmp.eq.s32.totalorder %s29, 1
      %p372 = por %p370, %p371
      %p374 = scmp.ne.s32.totalorder %s357, %s373
      %p375 = scmp.eq.s32.totalorder %s29, 0
      %p376 = por %p374, %p375
      %p377 = scmp.le.s32.totalorder 1, %s23
      %p378 = scmp.lt.s32.totalorder %s23, 3
      %p379 = pnand %p377, %p378
      %p380 = pneg %p379
      // Predicated region
      $region9: #{transformer_encoder_conv1d_forward.1} parent=5 // pred_check
        _
      $region10: #{transformer_encoder_conv1d_forward.1} parent=5 // pred_check_branch
        %382 = sbr.rel (%p379) target = $region12
      $region11: #{transformer_encoder_conv1d_forward.1} parent=5 // pred_region
        %s383 = ssub.s32 %s23, 1
        // Predicated region
        $region13: #{transformer_encoder_conv1d_forward.1} parent=11 // pred_check
          %p384 = pneg %p70
        $region14: #{transformer_encoder_conv1d_forward.1} parent=11 // pred_check_branch
          %386 = sbr.rel (%p384) target = $region16
        $region15: #{transformer_encoder_conv1d_forward.1} parent=11 // pred_region
          _
        $region16: #{transformer_encoder_conv1d_forward.1} parent=11 // pred_fallthru
          _
        // Predicated region
        $region17: #{transformer_encoder_conv1d_forward.1} parent=11 // pred_check
          %p387 = pneg %p91
        $region18: #{transformer_encoder_conv1d_forward.1} parent=11 // pred_check_branch
          %389 = sbr.rel (%p387) target = $region20
        $region19: #{transformer_encoder_conv1d_forward.1} parent=11 // pred_region
          _
        $region20: #{transformer_encoder_conv1d_forward.1} parent=11 // pred_fallthru
          _
        // Predicated region
        $region21: #{transformer_encoder_conv1d_forward.1} parent=11 // pred_check
          %p390 = pneg %p112
        $region22: #{transformer_encoder_conv1d_forward.1} parent=11 // pred_check_branch
          %392 = sbr.rel (%p390) target = $region24
        $region23: #{transformer_encoder_conv1d_forward.1} parent=11 // pred_region
          %s394 = ssub.s32 512, 512
          %395 = vsyncadd [#allocation4], %s394
          %s396 = sshll.u32 [#allocation3], 4
          %s397 = int_to_ptr.vmem [resolvable:$true] %s396
          %402 = dma.hbm_to_vmem [thread:$0]  %s3, 512, %s397, [#allocation4], 128, 128, 8
        $region24: #{transformer_encoder_conv1d_forward.1} parent=11 // pred_fallthru
          _
        // Predicated region
        $region25: #{transformer_encoder_conv1d_forward.1} parent=11 // pred_check
          %p403 = pneg %p133
        $region26: #{transformer_encoder_conv1d_forward.1} parent=11 // pred_check_branch
          %405 = sbr.rel (%p403) target = $region28
        $region27: #{transformer_encoder_conv1d_forward.1} parent=11 // pred_region
          _
        $region28: #{transformer_encoder_conv1d_forward.1} parent=11 // pred_fallthru
          _
        // Predicated region
        $region29: #{transformer_encoder_conv1d_forward.1} parent=11 // pred_check
          %p406 = pneg %p154
        $region30: #{transformer_encoder_conv1d_forward.1} parent=11 // pred_check_branch
          %408 = sbr.rel (%p406) target = $region32
        $region31: #{transformer_encoder_conv1d_forward.1} parent=11 // pred_region
          _
        $region32: #{transformer_encoder_conv1d_forward.1} parent=11 // pred_fallthru
          _
        // Predicated region
        $region33: #{transformer_encoder_conv1d_forward.1} parent=11 // pred_check
          %p409 = pneg %p175
        $region34: #{transformer_encoder_conv1d_forward.1} parent=11 // pred_check_branch
          %411 = sbr.rel (%p409) target = $region36
        $region35: #{transformer_encoder_conv1d_forward.1} parent=11 // pred_region
          _
        $region36: #{transformer_encoder_conv1d_forward.1} parent=11 // pred_fallthru
          _
        // Predicated region
        $region37: #{transformer_encoder_conv1d_forward.1} parent=11 // pred_check
          %p412 = pneg %p196
        $region38: #{transformer_encoder_conv1d_forward.1} parent=11 // pred_check_branch
          %414 = sbr.rel (%p412) target = $region40
        $region39: #{transformer_encoder_conv1d_forward.1} parent=11 // pred_region
          %s416 = ssub.s32 512, 512
          %417 = vsyncadd [#allocation6], %s416
          %s418 = sshll.u32 [#allocation5], 4
          %s419 = int_to_ptr.vmem [resolvable:$true] %s418
          %424 = dma.hbm_to_vmem [thread:$0]  %s7, 512, %s419, [#allocation6], 128, 128, 8
        $region40: #{transformer_encoder_conv1d_forward.1} parent=11 // pred_fallthru
          _
        // Predicated region
        $region41: #{transformer_encoder_conv1d_forward.1} parent=11 // pred_check
          %p425 = pneg %p217
        $region42: #{transformer_encoder_conv1d_forward.1} parent=11 // pred_check_branch
          %427 = sbr.rel (%p425) target = $region44
        $region43: #{transformer_encoder_conv1d_forward.1} parent=11 // pred_region
          _
        $region44: #{transformer_encoder_conv1d_forward.1} parent=11 // pred_fallthru
          _
        // Predicated region
        $region45: #{transformer_encoder_conv1d_forward.1} parent=11 // pred_check
          %p428 = pneg %p238
        $region46: #{transformer_encoder_conv1d_forward.1} parent=11 // pred_check_branch
          %430 = sbr.rel (%p428) target = $region48
        $region47: #{transformer_encoder_conv1d_forward.1} parent=11 // pred_region
          _
        $region48: #{transformer_encoder_conv1d_forward.1} parent=11 // pred_fallthru
          _
        // Predicated region
        $region49: #{transformer_encoder_conv1d_forward.1} parent=11 // pred_check
          %p431 = pneg %p259
        $region50: #{transformer_encoder_conv1d_forward.1} parent=11 // pred_check_branch
          %433 = sbr.rel (%p431) target = $region52
        $region51: #{transformer_encoder_conv1d_forward.1} parent=11 // pred_region
          _
        $region52: #{transformer_encoder_conv1d_forward.1} parent=11 // pred_fallthru
          _
        // Predicated region
        $region53: #{transformer_encoder_conv1d_forward.1} parent=11 // pred_check
          %p434 = pneg %p280
        $region54: #{transformer_encoder_conv1d_forward.1} parent=11 // pred_check_branch
          %436 = sbr.rel (%p434) target = $region56
        $region55: #{transformer_encoder_conv1d_forward.1} parent=11 // pred_region
          _
        $region56: #{transformer_encoder_conv1d_forward.1} parent=11 // pred_fallthru
          _
        // Predicated region
        $region57: #{transformer_encoder_conv1d_forward.1} parent=11 // pred_check
          %p437 = pneg %p301
        $region58: #{transformer_encoder_conv1d_forward.1} parent=11 // pred_check_branch
          %439 = sbr.rel (%p437) target = $region60
        $region59: #{transformer_encoder_conv1d_forward.1} parent=11 // pred_region
          _
        $region60: #{transformer_encoder_conv1d_forward.1} parent=11 // pred_fallthru
          _
        // Predicated region
        $region61: #{transformer_encoder_conv1d_forward.1} parent=11 // pred_check
          %p440 = pneg %p322
        $region62: #{transformer_encoder_conv1d_forward.1} parent=11 // pred_check_branch
          %442 = sbr.rel (%p440) target = $region64
        $region63: #{transformer_encoder_conv1d_forward.1} parent=11 // pred_region
          _
        $region64: #{transformer_encoder_conv1d_forward.1} parent=11 // pred_fallthru
          _
        // Predicated region
        $region65: #{transformer_encoder_conv1d_forward.1} parent=11 // pred_check
          %p443 = pneg %p343
        $region66: #{transformer_encoder_conv1d_forward.1} parent=11 // pred_check_branch
          %445 = sbr.rel (%p443) target = $region68
        $region67: #{transformer_encoder_conv1d_forward.1} parent=11 // pred_region
          _
        $region68: #{transformer_encoder_conv1d_forward.1} parent=11 // pred_fallthru
          _
      $region12: #{transformer_encoder_conv1d_forward.1} parent=5 // pred_fallthru
        _
      %p446 = scmp.lt.s32.totalorder %s23, 2
      // Predicated region
      $region69: #{transformer_encoder_conv1d_forward.1} parent=5 // pred_check
        %p447 = pneg %p446
      $region70: #{transformer_encoder_conv1d_forward.1} parent=5 // pred_check_branch
        %449 = sbr.rel (%p447) target = $region72
      $region71: #{transformer_encoder_conv1d_forward.1} parent=5 // pred_region
        // Predicated region
        $region73: #{transformer_encoder_conv1d_forward.1} parent=71 // pred_check
          %p450 = pneg %p43
        $region74: #{transformer_encoder_conv1d_forward.1} parent=71 // pred_check_branch
          %452 = sbr.rel (%p450) target = $region76
        $region75: #{transformer_encoder_conv1d_forward.1} parent=71 // pred_region
          %p453 = scmp.lt.s32.totalorder %s23, 1
          %s454 = scalar_select %p453, %s23, 1
          %s455 = smul.addr %s454, 8
          %s456 = scalar_lea.vmem %s0, %s455
        $region76: #{transformer_encoder_conv1d_forward.1} parent=71 // pred_fallthru
          _
      $region72: #{transformer_encoder_conv1d_forward.1} parent=5 // pred_fallthru
        _
      %p457 = scmp.le.s32.totalorder 1, %s23
      %p458 = scmp.lt.s32.totalorder %s23, 3
      %p459 = pnand %p457, %p458
      %p460 = pneg %p459
      // Predicated region
      $region77: #{transformer_encoder_conv1d_forward.1} parent=5 // pred_check
        _
      $region78: #{transformer_encoder_conv1d_forward.1} parent=5 // pred_check_branch
        %462 = sbr.rel (%p459) target = $region80
      $region79: #{transformer_encoder_conv1d_forward.1} parent=5 // pred_region
        %s463 = ssub.s32 %s23, 1
        // Predicated region
        $region81: #{transformer_encoder_conv1d_forward.1} parent=79 // pred_check
          %p464 = pneg %p112
        $region82: #{transformer_encoder_conv1d_forward.1} parent=79 // pred_check_branch
          %466 = sbr.rel (%p464) target = $region84
        $region83: #{transformer_encoder_conv1d_forward.1} parent=79 // pred_region
          %467 = dma.done [#allocation4], 512
        $region84: #{transformer_encoder_conv1d_forward.1} parent=79 // pred_fallthru
          _
        // Predicated region
        $region85: #{transformer_encoder_conv1d_forward.1} parent=79 // pred_check
          %p468 = pneg %p196
        $region86: #{transformer_encoder_conv1d_forward.1} parent=79 // pred_check_branch
          %470 = sbr.rel (%p468) target = $region88
        $region87: #{transformer_encoder_conv1d_forward.1} parent=79 // pred_region
          %471 = dma.done [#allocation6], 512
        $region88: #{transformer_encoder_conv1d_forward.1} parent=79 // pred_fallthru
          _
        %p472 = scmp.lt.s32.totalorder %s28, 1
        %s473 = scalar_select %p472, %s28, 1
        %s474 = smul.addr %s473, 8
        %s475 = scalar_lea.vmem %s0, %s474
        %p476 = pneg %p49
        %p477 = pneg %p46
        %p478 = pneg %p70
        %p479 = pneg %p67
        %p480 = pneg %p91
        %p481 = pneg %p88
        %p482 = pneg %p112
        %p483 = pneg %p109
        %p484 = pneg %p133
        %p485 = pneg %p130
        %p486 = pneg %p154
        %p487 = pneg %p151
        %p488 = pneg %p175
        %p489 = pneg %p172
        %p490 = pneg %p196
        %p491 = pneg %p193
        %p492 = pneg %p217
        %p493 = pneg %p214
        %p494 = pneg %p238
        %p495 = pneg %p235
        %p496 = pneg %p259
        %p497 = pneg %p256
        %p498 = pneg %p280
        %p499 = pneg %p277
        %p500 = pneg %p301
        %p501 = pneg %p298
        %p502 = pneg %p322
        %p503 = pneg %p319
        %p504 = pneg %p343
        %p505 = pneg %p340
        %p506 = pneg %p369
        %p507 = pneg %p366
        %p508 = scmp.lt.s32.totalorder %s28, 1
        %s509 = scalar_select %p508, %s28, 1
        %s510 = smul.addr %s509, 8
        %s511 = scalar_lea.vmem %s15, %s510
        %p512 = scmp.lt.s32.totalorder %s28, 1
        %s513 = scalar_select %p512, %s28, 1
        %s514 = smul.addr %s513, 8
        %s515 = scalar_lea.vmem %s0, %s514
        %p516 = scmp.lt.s32.totalorder %s28, 1
        %s517 = scalar_select %p516, %s28, 1
        %s518 = smul.addr %s517, 8
        %s519 = scalar_lea.vmem %s15, %s518
        %v520 = vld [vmem:[%s515] sm:$0xff]
        %v521 = vld [vmem:[%s1] sm:$0xff]
        %v522 = vld [vmem:[%s1 + $0x8] sm:$0xff]
        %v523 = vld [vmem:[%s1 + $0x10] sm:$0xff]
        %v524 = vld [vmem:[%s1 + $0x18] sm:$0xff]
        %v525 = vld [vmem:[%s2] sm:$0x1]
        %v527 = vlaneseq
        %v528 = vshrl.u32 %v527, 7
        %v529 = vsub.s32 0, %v528
        %v530 = vrot.slane %v525, %v529
        %vm532 = vcmask 261120
        %v534 = vsel %vm532, %v520, 0
        %536 = vmatprep.subr.mxu0 0.0
        %537 = vmatpush1.msra.mxu0 0.0
        %538 = vmatprep.subr.mxu0 0.0
        %539 = vmatpush1.msra.mxu0 0.0
        %540 = vmatprep.subr.mxu0 0.0
        %541 = vmatpush1.msra.mxu0 0.0
        %542 = vmatprep.subr.mxu0 0.0
        %543 = vmatpush1.msra.mxu0 0.0
        %544 = vmatprep.subr.mxu0 0.0
        %545 = vmatpush1.msra.mxu0 0.0
        %546 = vmatprep.subr.mxu0 0.0
        %547 = vmatpush1.msra.mxu0 0.0
        %548 = vmatprep.subr.mxu0 0.0
        %549 = vmatpush1.msra.mxu0 0.0
        %550 = vmatprep.subr.mxu0 0.0
        %551 = vmatpush1.msra.mxu0 0.0
        %552 = vmatprep.subr.mxu0 0.0
        %553 = vmatpush1.msra.mxu0 0.0
        %554 = vmatprep.subr.mxu0 0.0
        %555 = vmatpush1.msra.mxu0 0.0
        %556 = vmatprep.subr.mxu0 0.0
        %557 = vmatpush1.msra.mxu0 0.0
        %558 = vmatprep.subr.mxu0 0.0
        %559 = vmatpush1.msra.mxu0 0.0
        %560 = vmatprep.subr.mxu0 0.0
        %561 = vmatpush1.msra.mxu0 %v524
        %562 = vmatprep.subr.mxu0 0.0
        %563 = vmatpush1.msra.mxu0 %v523
        %564 = vmatprep.subr.mxu0 0.0
        %565 = vmatpush1.msra.mxu0 %v522
        %566 = vmatprep.subr.mxu0 0.0
        %567 = vmatpush1.msra.mxu0 %v521
        %568 = vmatprep.subr.mxu0 0.0
        %569 = vmatpush2.msra.mxu0 0.0
        %570 = vmatprep.subr.mxu0 0.0
        %571 = vmatpush2.msra.mxu0 0.0
        %572 = vmatprep.subr.mxu0 0.0
        %573 = vmatpush2.msra.mxu0 0.0
        %574 = vmatprep.subr.mxu0 0.0
        %575 = vmatpush2.msra.mxu0 0.0
        %576 = vmatprep.subr.mxu0 0.0
        %577 = vmatpush2.msra.mxu0 0.0
        %578 = vmatprep.subr.mxu0 0.0
        %579 = vmatpush2.msra.mxu0 0.0
        %580 = vmatprep.subr.mxu0 0.0
        %581 = vmatpush2.msra.mxu0 0.0
        %582 = vmatprep.subr.mxu0 0.0
        %583 = vmatpush2.msra.mxu0 0.0
        %584 = vmatprep.subr.mxu0 0.0
        %585 = vmatpush2.msra.mxu0 0.0
        %586 = vmatprep.subr.mxu0 0.0
        %587 = vmatpush2.msra.mxu0 0.0
        %588 = vmatprep.subr.mxu0 0.0
        %589 = vmatpush2.msra.mxu0 0.0
        %590 = vmatprep.subr.mxu0 0.0
        %591 = vmatpush2.msra.mxu0 0.0
        %592 = vmatprep.subr.mxu0 0.0
        %593 = vmatpush2.msra.mxu0 0.0
        %594 = vmatprep.subr.mxu0 0.0
        %595 = vmatpush2.msra.mxu0 0.0
        %596 = vmatprep.subr.mxu0 0.0
        %597 = vmatpush2.msra.mxu0 0.0
        %598 = vmatprep.subr.mxu0 0.0
        %599 = vmatpush2.msra.mxu0 0.0
        %600 = vmatprep.mubr.f32.mxu0 0.0
        %601 = vmatmul.mubr.f32.gmra.mxu0 %v534
        %v602 = vpop.f32.mrf.mxu0
        %v603 = vadd.f32 %v530, %v602
        %v604 = vpop.f32.mrf.mxu0
        %605 = vdwg.mxu0
        %v606 = vmul.f32 %v603, 0.35355338
        %v607 = vld [vmem:[#allocation3] sm:$0xff]
        %v608 = vld [vmem:[#allocation3 + $0x8] sm:$0xff]
        %v609 = vld [vmem:[#allocation3 + $0x10] sm:$0xff]
        %v610 = vld [vmem:[#allocation3 + $0x18] sm:$0xff]
        %v611 = vld [vmem:[%s4] sm:$0x1]
        %v613 = vlaneseq
        %v614 = vshrl.u32 %v613, 7
        %v615 = vsub.s32 0, %v614
        %v616 = vrot.slane %v611, %v615
        %v618 = vadd.f32 %v616, 0.0
        %620 = vrot.lane.b32.xlu0 %v603, 96
        %v621 = vpop.permute.xlu0 %620
        %vm622 = vcmask 64512
        %v624 = vsel %vm622, %v606, 0
        %v626 = vsel %vm622, %v621, 0
        %628 = vmatprep.subr.mxu0 0.0
        %629 = vmatpush1.xpose.msra.mxu0 0.0
        %630 = vmatprep.subr.mxu0 0.0
        %631 = vmatpush1.xpose.msra.mxu0 0.0
        %632 = vmatprep.subr.mxu0 0.0
        %633 = vmatpush1.xpose.msra.mxu0 0.0
        %634 = vmatprep.subr.mxu0 0.0
        %635 = vmatpush1.xpose.msra.mxu0 0.0
        %636 = vmatprep.subr.mxu0 0.0
        %637 = vmatpush1.xpose.msra.mxu0 0.0
        %638 = vmatprep.subr.mxu0 0.0
        %639 = vmatpush1.xpose.msra.mxu0 0.0
        %640 = vmatprep.subr.mxu0 0.0
        %641 = vmatpush1.xpose.msra.mxu0 0.0
        %642 = vmatprep.subr.mxu0 0.0
        %643 = vmatpush1.xpose.msra.mxu0 0.0
        %644 = vmatprep.subr.mxu0 0.0
        %645 = vmatpush1.xpose.msra.mxu0 0.0
        %646 = vmatprep.subr.mxu0 0.0
        %647 = vmatpush1.xpose.msra.mxu0 0.0
        %648 = vmatprep.subr.mxu0 0.0
        %649 = vmatpush1.xpose.msra.mxu0 0.0
        %650 = vmatprep.subr.mxu0 0.0
        %651 = vmatpush1.xpose.msra.mxu0 0.0
        %652 = vmatprep.subr.mxu0 0.0
        %653 = vmatpush1.xpose.msra.mxu0 0.0
        %654 = vmatprep.subr.mxu0 0.0
        %655 = vmatpush1.xpose.msra.mxu0 0.0
        %656 = vmatprep.subr.mxu0 0.0
        %657 = vmatpush1.xpose.msra.mxu0 0.0
        %658 = vmatprep.subr.mxu0 0.0
        %659 = vmatpush1.xpose.msra.mxu0 %v626
        %660 = vmatprep.subr.mxu0 0.0
        %661 = vmatpush2.xpose.msra.mxu0 0.0
        %662 = vmatprep.subr.mxu0 0.0
        %663 = vmatpush2.xpose.msra.mxu0 0.0
        %664 = vmatprep.subr.mxu0 0.0
        %665 = vmatpush2.xpose.msra.mxu0 0.0
        %666 = vmatprep.subr.mxu0 0.0
        %667 = vmatpush2.xpose.msra.mxu0 0.0
        %668 = vmatprep.subr.mxu0 0.0
        %669 = vmatpush2.xpose.msra.mxu0 0.0
        %670 = vmatprep.subr.mxu0 0.0
        %671 = vmatpush2.xpose.msra.mxu0 0.0
        %672 = vmatprep.subr.mxu0 0.0
        %673 = vmatpush2.xpose.msra.mxu0 0.0
        %674 = vmatprep.subr.mxu0 0.0
        %675 = vmatpush2.xpose.msra.mxu0 0.0
        %676 = vmatprep.subr.mxu0 0.0
        %677 = vmatpush2.xpose.msra.mxu0 0.0
        %678 = vmatprep.subr.mxu0 0.0
        %679 = vmatpush2.xpose.msra.mxu0 0.0
        %680 = vmatprep.subr.mxu0 0.0
        %681 = vmatpush2.xpose.msra.mxu0 0.0
        %682 = vmatprep.subr.mxu0 0.0
        %683 = vmatpush2.xpose.msra.mxu0 0.0
        %684 = vmatprep.subr.mxu0 0.0
        %685 = vmatpush2.xpose.msra.mxu0 0.0
        %686 = vmatprep.subr.mxu0 0.0
        %687 = vmatpush2.xpose.msra.mxu0 0.0
        %688 = vmatprep.subr.mxu0 0.0
        %689 = vmatpush2.xpose.msra.mxu0 0.0
        %690 = vmatprep.subr.mxu0 0.0
        %691 = vmatpush2.xpose.msra.mxu0 0.0
        %692 = vmatprep.mubr.f32.mxu0 0.0
        %693 = vmatmul.mubr.f32.gmra.mxu0 %v624
        %v694 = vpop.f32.mrf.mxu0
        %v695 = vadd.f32 0.0, %v694
        %v696 = vpop.f32.mrf.mxu0
        %697 = vdwg.mxu0
        %v698 = vsel %vm622, %v695, -inf
        %699 = vmax.xlane.f32.xlu0 %v698
        %v700 = vpop.xlane.xlu0 %699
        %v701 = vsub.f32 %v695, %v700
        %v702 = vmul.f32 %v701, 1.442695
        %v703 = vpow.pop %v702
        %v704 = vsel %vm622, %v703, 0.0
        %705 = vadd.xlane.f32.xlu0 %v704
        %v706 = vpop.xlane.xlu0 %705
        %v707 = vrcp.pop %v706
        %v708 = vmul.f32 %v703, %v707
        %709 = vrot.lane.b32.xlu0 %v603, 64
        %v710 = vpop.permute.xlu0 %709
        %v713 = vsel %vm622, %v708, 0
        %715 = vmatprep.subr.mxu0 0.0
        %716 = vmatpush1.msra.mxu0 0.0
        %717 = vmatprep.subr.mxu0 0.0
        %718 = vmatpush1.msra.mxu0 0.0
        %719 = vmatprep.subr.mxu0 0.0
        %720 = vmatpush1.msra.mxu0 0.0
        %721 = vmatprep.subr.mxu0 0.0
        %722 = vmatpush1.msra.mxu0 0.0
        %723 = vmatprep.subr.mxu0 0.0
        %724 = vmatpush1.msra.mxu0 0.0
        %725 = vmatprep.subr.mxu0 0.0
        %726 = vmatpush1.msra.mxu0 0.0
        %727 = vmatprep.subr.mxu0 0.0
        %728 = vmatpush1.msra.mxu0 0.0
        %729 = vmatprep.subr.mxu0 0.0
        %730 = vmatpush1.msra.mxu0 0.0
        %731 = vmatprep.subr.mxu0 0.0
        %732 = vmatpush1.msra.mxu0 0.0
        %733 = vmatprep.subr.mxu0 0.0
        %734 = vmatpush1.msra.mxu0 0.0
        %735 = vmatprep.subr.mxu0 0.0
        %736 = vmatpush1.msra.mxu0 0.0
        %737 = vmatprep.subr.mxu0 0.0
        %738 = vmatpush1.msra.mxu0 0.0
        %739 = vmatprep.subr.mxu0 0.0
        %740 = vmatpush1.msra.mxu0 0.0
        %741 = vmatprep.subr.mxu0 0.0
        %742 = vmatpush1.msra.mxu0 0.0
        %743 = vmatprep.subr.mxu0 0.0
        %744 = vmatpush1.msra.mxu0 0.0
        %745 = vmatprep.subr.mxu0 0.0
        %746 = vmatpush1.msra.mxu0 %v710
        %747 = vmatprep.subr.mxu0 0.0
        %748 = vmatpush2.msra.mxu0 0.0
        %749 = vmatprep.subr.mxu0 0.0
        %750 = vmatpush2.msra.mxu0 0.0
        %751 = vmatprep.subr.mxu0 0.0
        %752 = vmatpush2.msra.mxu0 0.0
        %753 = vmatprep.subr.mxu0 0.0
        %754 = vmatpush2.msra.mxu0 0.0
        %755 = vmatprep.subr.mxu0 0.0
        %756 = vmatpush2.msra.mxu0 0.0
        %757 = vmatprep.subr.mxu0 0.0
        %758 = vmatpush2.msra.mxu0 0.0
        %759 = vmatprep.subr.mxu0 0.0
        %760 = vmatpush2.msra.mxu0 0.0
        %761 = vmatprep.subr.mxu0 0.0
        %762 = vmatpush2.msra.mxu0 0.0
        %763 = vmatprep.subr.mxu0 0.0
        %764 = vmatpush2.msra.mxu0 0.0
        %765 = vmatprep.subr.mxu0 0.0
        %766 = vmatpush2.msra.mxu0 0.0
        %767 = vmatprep.subr.mxu0 0.0
        %768 = vmatpush2.msra.mxu0 0.0
        %769 = vmatprep.subr.mxu0 0.0
        %770 = vmatpush2.msra.mxu0 0.0
        %771 = vmatprep.subr.mxu0 0.0
        %772 = vmatpush2.msra.mxu0 0.0
        %773 = vmatprep.subr.mxu0 0.0
        %774 = vmatpush2.msra.mxu0 0.0
        %775 = vmatprep.subr.mxu0 0.0
        %776 = vmatpush2.msra.mxu0 0.0
        %777 = vmatprep.subr.mxu0 0.0
        %778 = vmatpush2.msra.mxu0 0.0
        %779 = vmatprep.mubr.f32.mxu0 0.0
        %780 = vmatmul.mubr.f32.gmra.mxu0 %v713
        %v781 = vpop.f32.mrf.mxu0
        %v782 = vadd.f32 0.0, %v781
        %v783 = vpop.f32.mrf.mxu0
        %784 = vdwg.mxu0
        %v786 = vsel %vm622, %v782, 0
        %788 = vmatprep.subr.mxu0 0.0
        %789 = vmatpush1.msra.mxu0 0.0
        %790 = vmatprep.subr.mxu0 0.0
        %791 = vmatpush1.msra.mxu0 0.0
        %792 = vmatprep.subr.mxu0 0.0
        %793 = vmatpush1.msra.mxu0 0.0
        %794 = vmatprep.subr.mxu0 0.0
        %795 = vmatpush1.msra.mxu0 0.0
        %796 = vmatprep.subr.mxu0 0.0
        %797 = vmatpush1.msra.mxu0 0.0
        %798 = vmatprep.subr.mxu0 0.0
        %799 = vmatpush1.msra.mxu0 0.0
        %800 = vmatprep.subr.mxu0 0.0
        %801 = vmatpush1.msra.mxu0 0.0
        %802 = vmatprep.subr.mxu0 0.0
        %803 = vmatpush1.msra.mxu0 0.0
        %804 = vmatprep.subr.mxu0 0.0
        %805 = vmatpush1.msra.mxu0 0.0
        %806 = vmatprep.subr.mxu0 0.0
        %807 = vmatpush1.msra.mxu0 0.0
        %808 = vmatprep.subr.mxu0 0.0
        %809 = vmatpush1.msra.mxu0 0.0
        %810 = vmatprep.subr.mxu0 0.0
        %811 = vmatpush1.msra.mxu0 0.0
        %812 = vmatprep.subr.mxu0 0.0
        %813 = vmatpush1.msra.mxu0 0.0
        %814 = vmatprep.subr.mxu0 0.0
        %815 = vmatpush1.msra.mxu0 0.0
        %816 = vmatprep.subr.mxu0 0.0
        %817 = vmatpush1.msra.mxu0 0.0
        %818 = vmatprep.subr.mxu0 0.0
        %819 = vmatpush1.msra.mxu0 %v607
        %820 = vmatprep.subr.mxu0 0.0
        %821 = vmatpush2.msra.mxu0 0.0
        %822 = vmatprep.subr.mxu0 0.0
        %823 = vmatpush2.msra.mxu0 0.0
        %824 = vmatprep.subr.mxu0 0.0
        %825 = vmatpush2.msra.mxu0 0.0
        %826 = vmatprep.subr.mxu0 0.0
        %827 = vmatpush2.msra.mxu0 0.0
        %828 = vmatprep.subr.mxu0 0.0
        %829 = vmatpush2.msra.mxu0 0.0
        %830 = vmatprep.subr.mxu0 0.0
        %831 = vmatpush2.msra.mxu0 0.0
        %832 = vmatprep.subr.mxu0 0.0
        %833 = vmatpush2.msra.mxu0 0.0
        %834 = vmatprep.subr.mxu0 0.0
        %835 = vmatpush2.msra.mxu0 0.0
        %836 = vmatprep.subr.mxu0 0.0
        %837 = vmatpush2.msra.mxu0 0.0
        %838 = vmatprep.subr.mxu0 0.0
        %839 = vmatpush2.msra.mxu0 0.0
        %840 = vmatprep.subr.mxu0 0.0
        %841 = vmatpush2.msra.mxu0 0.0
        %842 = vmatprep.subr.mxu0 0.0
        %843 = vmatpush2.msra.mxu0 0.0
        %844 = vmatprep.subr.mxu0 0.0
        %845 = vmatpush2.msra.mxu0 0.0
        %846 = vmatprep.subr.mxu0 0.0
        %847 = vmatpush2.msra.mxu0 0.0
        %848 = vmatprep.subr.mxu0 0.0
        %849 = vmatpush2.msra.mxu0 0.0
        %850 = vmatprep.subr.mxu0 0.0
        %851 = vmatpush2.msra.mxu0 0.0
        %852 = vmatprep.mubr.f32.mxu0 0.0
        %853 = vmatmul.mubr.f32.gmra.mxu0 %v786
        %v854 = vpop.f32.mrf.mxu0
        %v855 = vadd.f32 0.0, %v854
        %v856 = vpop.f32.mrf.mxu0
        %857 = vdwg.mxu0
        %v858 = vadd.f32 %v618, %v855
        %859 = vrot.lane.b32.xlu0 %v606, 120
        %v860 = vpop.permute.xlu0 %859
        %861 = vrot.lane.b32.xlu0 %v603, 88
        %v862 = vpop.permute.xlu0 %861
        %v863 = vsel %vm622, %v860, 0
        %v865 = vsel %vm622, %v862, 0
        %867 = vmatprep.subr.mxu0 0.0
        %868 = vmatpush1.xpose.msra.mxu0 0.0
        %869 = vmatprep.subr.mxu0 0.0
        %870 = vmatpush1.xpose.msra.mxu0 0.0
        %871 = vmatprep.subr.mxu0 0.0
        %872 = vmatpush1.xpose.msra.mxu0 0.0
        %873 = vmatprep.subr.mxu0 0.0
        %874 = vmatpush1.xpose.msra.mxu0 0.0
        %875 = vmatprep.subr.mxu0 0.0
        %876 = vmatpush1.xpose.msra.mxu0 0.0
        %877 = vmatprep.subr.mxu0 0.0
        %878 = vmatpush1.xpose.msra.mxu0 0.0
        %879 = vmatprep.subr.mxu0 0.0
        %880 = vmatpush1.xpose.msra.mxu0 0.0
        %881 = vmatprep.subr.mxu0 0.0
        %882 = vmatpush1.xpose.msra.mxu0 0.0
        %883 = vmatprep.subr.mxu0 0.0
        %884 = vmatpush1.xpose.msra.mxu0 0.0
        %885 = vmatprep.subr.mxu0 0.0
        %886 = vmatpush1.xpose.msra.mxu0 0.0
        %887 = vmatprep.subr.mxu0 0.0
        %888 = vmatpush1.xpose.msra.mxu0 0.0
        %889 = vmatprep.subr.mxu0 0.0
        %890 = vmatpush1.xpose.msra.mxu0 0.0
        %891 = vmatprep.subr.mxu0 0.0
        %892 = vmatpush1.xpose.msra.mxu0 0.0
        %893 = vmatprep.subr.mxu0 0.0
        %894 = vmatpush1.xpose.msra.mxu0 0.0
        %895 = vmatprep.subr.mxu0 0.0
        %896 = vmatpush1.xpose.msra.mxu0 0.0
        %897 = vmatprep.subr.mxu0 0.0
        %898 = vmatpush1.xpose.msra.mxu0 %v865
        %899 = vmatprep.subr.mxu0 0.0
        %900 = vmatpush2.xpose.msra.mxu0 0.0
        %901 = vmatprep.subr.mxu0 0.0
        %902 = vmatpush2.xpose.msra.mxu0 0.0
        %903 = vmatprep.subr.mxu0 0.0
        %904 = vmatpush2.xpose.msra.mxu0 0.0
        %905 = vmatprep.subr.mxu0 0.0
        %906 = vmatpush2.xpose.msra.mxu0 0.0
        %907 = vmatprep.subr.mxu0 0.0
        %908 = vmatpush2.xpose.msra.mxu0 0.0
        %909 = vmatprep.subr.mxu0 0.0
        %910 = vmatpush2.xpose.msra.mxu0 0.0
        %911 = vmatprep.subr.mxu0 0.0
        %912 = vmatpush2.xpose.msra.mxu0 0.0
        %913 = vmatprep.subr.mxu0 0.0
        %914 = vmatpush2.xpose.msra.mxu0 0.0
        %915 = vmatprep.subr.mxu0 0.0
        %916 = vmatpush2.xpose.msra.mxu0 0.0
        %917 = vmatprep.subr.mxu0 0.0
        %918 = vmatpush2.xpose.msra.mxu0 0.0
        %919 = vmatprep.subr.mxu0 0.0
        %920 = vmatpush2.xpose.msra.mxu0 0.0
        %921 = vmatprep.subr.mxu0 0.0
        %922 = vmatpush2.xpose.msra.mxu0 0.0
        %923 = vmatprep.subr.mxu0 0.0
        %924 = vmatpush2.xpose.msra.mxu0 0.0
        %925 = vmatprep.subr.mxu0 0.0
        %926 = vmatpush2.xpose.msra.mxu0 0.0
        %927 = vmatprep.subr.mxu0 0.0
        %928 = vmatpush2.xpose.msra.mxu0 0.0
        %929 = vmatprep.subr.mxu0 0.0
        %930 = vmatpush2.xpose.msra.mxu0 0.0
        %931 = vmatprep.mubr.f32.mxu0 0.0
        %932 = vmatmul.mubr.f32.gmra.mxu0 %v863
        %v933 = vpop.f32.mrf.mxu0
        %v934 = vadd.f32 0.0, %v933
        %v935 = vpop.f32.mrf.mxu0
        %936 = vdwg.mxu0
        %v937 = vsel %vm622, %v934, -inf
        %938 = vmax.xlane.f32.xlu0 %v937
        %v939 = vpop.xlane.xlu0 %938
        %v940 = vsub.f32 %v934, %v939
        %v941 = vmul.f32 %v940, 1.442695
        %v942 = vpow.pop %v941
        %v943 = vsel %vm622, %v942, 0.0
        %944 = vadd.xlane.f32.xlu0 %v943
        %v945 = vpop.xlane.xlu0 %944
        %v946 = vrcp.pop %v945
        %v947 = vmul.f32 %v942, %v946
        %948 = vrot.lane.b32.xlu0 %v603, 56
        %v949 = vpop.permute.xlu0 %948
        %v952 = vsel %vm622, %v947, 0
        %954 = vmatprep.subr.mxu0 0.0
        %955 = vmatpush1.msra.mxu0 0.0
        %956 = vmatprep.subr.mxu0 0.0
        %957 = vmatpush1.msra.mxu0 0.0
        %958 = vmatprep.subr.mxu0 0.0
        %959 = vmatpush1.msra.mxu0 0.0
        %960 = vmatprep.subr.mxu0 0.0
        %961 = vmatpush1.msra.mxu0 0.0
        %962 = vmatprep.subr.mxu0 0.0
        %963 = vmatpush1.msra.mxu0 0.0
        %964 = vmatprep.subr.mxu0 0.0
        %965 = vmatpush1.msra.mxu0 0.0
        %966 = vmatprep.subr.mxu0 0.0
        %967 = vmatpush1.msra.mxu0 0.0
        %968 = vmatprep.subr.mxu0 0.0
        %969 = vmatpush1.msra.mxu0 0.0
        %970 = vmatprep.subr.mxu0 0.0
        %971 = vmatpush1.msra.mxu0 0.0
        %972 = vmatprep.subr.mxu0 0.0
        %973 = vmatpush1.msra.mxu0 0.0
        %974 = vmatprep.subr.mxu0 0.0
        %975 = vmatpush1.msra.mxu0 0.0
        %976 = vmatprep.subr.mxu0 0.0
        %977 = vmatpush1.msra.mxu0 0.0
        %978 = vmatprep.subr.mxu0 0.0
        %979 = vmatpush1.msra.mxu0 0.0
        %980 = vmatprep.subr.mxu0 0.0
        %981 = vmatpush1.msra.mxu0 0.0
        %982 = vmatprep.subr.mxu0 0.0
        %983 = vmatpush1.msra.mxu0 0.0
        %984 = vmatprep.subr.mxu0 0.0
        %985 = vmatpush1.msra.mxu0 %v949
        %986 = vmatprep.subr.mxu0 0.0
        %987 = vmatpush2.msra.mxu0 0.0
        %988 = vmatprep.subr.mxu0 0.0
        %989 = vmatpush2.msra.mxu0 0.0
        %990 = vmatprep.subr.mxu0 0.0
        %991 = vmatpush2.msra.mxu0 0.0
        %992 = vmatprep.subr.mxu0 0.0
        %993 = vmatpush2.msra.mxu0 0.0
        %994 = vmatprep.subr.mxu0 0.0
        %995 = vmatpush2.msra.mxu0 0.0
        %996 = vmatprep.subr.mxu0 0.0
        %997 = vmatpush2.msra.mxu0 0.0
        %998 = vmatprep.subr.mxu0 0.0
        %999 = vmatpush2.msra.mxu0 0.0
        %1000 = vmatprep.subr.mxu0 0.0
        %1001 = vmatpush2.msra.mxu0 0.0
        %1002 = vmatprep.subr.mxu0 0.0
        %1003 = vmatpush2.msra.mxu0 0.0
        %1004 = vmatprep.subr.mxu0 0.0
        %1005 = vmatpush2.msra.mxu0 0.0
        %1006 = vmatprep.subr.mxu0 0.0
        %1007 = vmatpush2.msra.mxu0 0.0
        %1008 = vmatprep.subr.mxu0 0.0
        %1009 = vmatpush2.msra.mxu0 0.0
        %1010 = vmatprep.subr.mxu0 0.0
        %1011 = vmatpush2.msra.mxu0 0.0
        %1012 = vmatprep.subr.mxu0 0.0
        %1013 = vmatpush2.msra.mxu0 0.0
        %1014 = vmatprep.subr.mxu0 0.0
        %1015 = vmatpush2.msra.mxu0 0.0
        %1016 = vmatprep.subr.mxu0 0.0
        %1017 = vmatpush2.msra.mxu0 0.0
        %1018 = vmatprep.mubr.f32.mxu0 0.0
        %1019 = vmatmul.mubr.f32.gmra.mxu0 %v952
        %v1020 = vpop.f32.mrf.mxu0
        %v1021 = vadd.f32 0.0, %v1020
        %v1022 = vpop.f32.mrf.mxu0
        %1023 = vdwg.mxu0
        %v1025 = vsel %vm622, %v1021, 0
        %1027 = vmatprep.subr.mxu0 0.0
        %1028 = vmatpush1.msra.mxu0 0.0
        %1029 = vmatprep.subr.mxu0 0.0
        %1030 = vmatpush1.msra.mxu0 0.0
        %1031 = vmatprep.subr.mxu0 0.0
        %1032 = vmatpush1.msra.mxu0 0.0
        %1033 = vmatprep.subr.mxu0 0.0
        %1034 = vmatpush1.msra.mxu0 0.0
        %1035 = vmatprep.subr.mxu0 0.0
        %1036 = vmatpush1.msra.mxu0 0.0
        %1037 = vmatprep.subr.mxu0 0.0
        %1038 = vmatpush1.msra.mxu0 0.0
        %1039 = vmatprep.subr.mxu0 0.0
        %1040 = vmatpush1.msra.mxu0 0.0
        %1041 = vmatprep.subr.mxu0 0.0
        %1042 = vmatpush1.msra.mxu0 0.0
        %1043 = vmatprep.subr.mxu0 0.0
        %1044 = vmatpush1.msra.mxu0 0.0
        %1045 = vmatprep.subr.mxu0 0.0
        %1046 = vmatpush1.msra.mxu0 0.0
        %1047 = vmatprep.subr.mxu0 0.0
        %1048 = vmatpush1.msra.mxu0 0.0
        %1049 = vmatprep.subr.mxu0 0.0
        %1050 = vmatpush1.msra.mxu0 0.0
        %1051 = vmatprep.subr.mxu0 0.0
        %1052 = vmatpush1.msra.mxu0 0.0
        %1053 = vmatprep.subr.mxu0 0.0
        %1054 = vmatpush1.msra.mxu0 0.0
        %1055 = vmatprep.subr.mxu0 0.0
        %1056 = vmatpush1.msra.mxu0 0.0
        %1057 = vmatprep.subr.mxu0 0.0
        %1058 = vmatpush1.msra.mxu0 %v608
        %1059 = vmatprep.subr.mxu0 0.0
        %1060 = vmatpush2.msra.mxu0 0.0
        %1061 = vmatprep.subr.mxu0 0.0
        %1062 = vmatpush2.msra.mxu0 0.0
        %1063 = vmatprep.subr.mxu0 0.0
        %1064 = vmatpush2.msra.mxu0 0.0
        %1065 = vmatprep.subr.mxu0 0.0
        %1066 = vmatpush2.msra.mxu0 0.0
        %1067 = vmatprep.subr.mxu0 0.0
        %1068 = vmatpush2.msra.mxu0 0.0
        %1069 = vmatprep.subr.mxu0 0.0
        %1070 = vmatpush2.msra.mxu0 0.0
        %1071 = vmatprep.subr.mxu0 0.0
        %1072 = vmatpush2.msra.mxu0 0.0
        %1073 = vmatprep.subr.mxu0 0.0
        %1074 = vmatpush2.msra.mxu0 0.0
        %1075 = vmatprep.subr.mxu0 0.0
        %1076 = vmatpush2.msra.mxu0 0.0
        %1077 = vmatprep.subr.mxu0 0.0
        %1078 = vmatpush2.msra.mxu0 0.0
        %1079 = vmatprep.subr.mxu0 0.0
        %1080 = vmatpush2.msra.mxu0 0.0
        %1081 = vmatprep.subr.mxu0 0.0
        %1082 = vmatpush2.msra.mxu0 0.0
        %1083 = vmatprep.subr.mxu0 0.0
        %1084 = vmatpush2.msra.mxu0 0.0
        %1085 = vmatprep.subr.mxu0 0.0
        %1086 = vmatpush2.msra.mxu0 0.0
        %1087 = vmatprep.subr.mxu0 0.0
        %1088 = vmatpush2.msra.mxu0 0.0
        %1089 = vmatprep.subr.mxu0 0.0
        %1090 = vmatpush2.msra.mxu0 0.0
        %1091 = vmatprep.mubr.f32.mxu0 0.0
        %1092 = vmatmul.mubr.f32.gmra.mxu0 %v1025
        %v1093 = vpop.f32.mrf.mxu0
        %v1094 = vadd.f32 0.0, %v1093
        %v1095 = vpop.f32.mrf.mxu0
        %1096 = vdwg.mxu0
        %v1097 = vadd.f32 %v858, %v1094
        %1098 = vrot.lane.b32.xlu0 %v606, 112
        %v1099 = vpop.permute.xlu0 %1098
        %1100 = vrot.lane.b32.xlu0 %v603, 80
        %v1101 = vpop.permute.xlu0 %1100
        %v1102 = vsel %vm622, %v1099, 0
        %v1104 = vsel %vm622, %v1101, 0
        %1106 = vmatprep.subr.mxu0 0.0
        %1107 = vmatpush1.xpose.msra.mxu0 0.0
        %1108 = vmatprep.subr.mxu0 0.0
        %1109 = vmatpush1.xpose.msra.mxu0 0.0
        %1110 = vmatprep.subr.mxu0 0.0
        %1111 = vmatpush1.xpose.msra.mxu0 0.0
        %1112 = vmatprep.subr.mxu0 0.0
        %1113 = vmatpush1.xpose.msra.mxu0 0.0
        %1114 = vmatprep.subr.mxu0 0.0
        %1115 = vmatpush1.xpose.msra.mxu0 0.0
        %1116 = vmatprep.subr.mxu0 0.0
        %1117 = vmatpush1.xpose.msra.mxu0 0.0
        %1118 = vmatprep.subr.mxu0 0.0
        %1119 = vmatpush1.xpose.msra.mxu0 0.0
        %1120 = vmatprep.subr.mxu0 0.0
        %1121 = vmatpush1.xpose.msra.mxu0 0.0
        %1122 = vmatprep.subr.mxu0 0.0
        %1123 = vmatpush1.xpose.msra.mxu0 0.0
        %1124 = vmatprep.subr.mxu0 0.0
        %1125 = vmatpush1.xpose.msra.mxu0 0.0
        %1126 = vmatprep.subr.mxu0 0.0
        %1127 = vmatpush1.xpose.msra.mxu0 0.0
        %1128 = vmatprep.subr.mxu0 0.0
        %1129 = vmatpush1.xpose.msra.mxu0 0.0
        %1130 = vmatprep.subr.mxu0 0.0
        %1131 = vmatpush1.xpose.msra.mxu0 0.0
        %1132 = vmatprep.subr.mxu0 0.0
        %1133 = vmatpush1.xpose.msra.mxu0 0.0
        %1134 = vmatprep.subr.mxu0 0.0
        %1135 = vmatpush1.xpose.msra.mxu0 0.0
        %1136 = vmatprep.subr.mxu0 0.0
        %1137 = vmatpush1.xpose.msra.mxu0 %v1104
        %1138 = vmatprep.subr.mxu0 0.0
        %1139 = vmatpush2.xpose.msra.mxu0 0.0
        %1140 = vmatprep.subr.mxu0 0.0
        %1141 = vmatpush2.xpose.msra.mxu0 0.0
        %1142 = vmatprep.subr.mxu0 0.0
        %1143 = vmatpush2.xpose.msra.mxu0 0.0
        %1144 = vmatprep.subr.mxu0 0.0
        %1145 = vmatpush2.xpose.msra.mxu0 0.0
        %1146 = vmatprep.subr.mxu0 0.0
        %1147 = vmatpush2.xpose.msra.mxu0 0.0
        %1148 = vmatprep.subr.mxu0 0.0
        %1149 = vmatpush2.xpose.msra.mxu0 0.0
        %1150 = vmatprep.subr.mxu0 0.0
        %1151 = vmatpush2.xpose.msra.mxu0 0.0
        %1152 = vmatprep.subr.mxu0 0.0
        %1153 = vmatpush2.xpose.msra.mxu0 0.0
        %1154 = vmatprep.subr.mxu0 0.0
        %1155 = vmatpush2.xpose.msra.mxu0 0.0
        %1156 = vmatprep.subr.mxu0 0.0
        %1157 = vmatpush2.xpose.msra.mxu0 0.0
        %1158 = vmatprep.subr.mxu0 0.0
        %1159 = vmatpush2.xpose.msra.mxu0 0.0
        %1160 = vmatprep.subr.mxu0 0.0
        %1161 = vmatpush2.xpose.msra.mxu0 0.0
        %1162 = vmatprep.subr.mxu0 0.0
        %1163 = vmatpush2.xpose.msra.mxu0 0.0
        %1164 = vmatprep.subr.mxu0 0.0
        %1165 = vmatpush2.xpose.msra.mxu0 0.0
        %1166 = vmatprep.subr.mxu0 0.0
        %1167 = vmatpush2.xpose.msra.mxu0 0.0
        %1168 = vmatprep.subr.mxu0 0.0
        %1169 = vmatpush2.xpose.msra.mxu0 0.0
        %1170 = vmatprep.mubr.f32.mxu0 0.0
        %1171 = vmatmul.mubr.f32.gmra.mxu0 %v1102
        %v1172 = vpop.f32.mrf.mxu0
        %v1173 = vadd.f32 0.0, %v1172
        %v1174 = vpop.f32.mrf.mxu0
        %1175 = vdwg.mxu0
        %v1176 = vsel %vm622, %v1173, -inf
        %1177 = vmax.xlane.f32.xlu0 %v1176
        %v1178 = vpop.xlane.xlu0 %1177
        %v1179 = vsub.f32 %v1173, %v1178
        %v1180 = vmul.f32 %v1179, 1.442695
        %v1181 = vpow.pop %v1180
        %v1182 = vsel %vm622, %v1181, 0.0
        %1183 = vadd.xlane.f32.xlu0 %v1182
        %v1184 = vpop.xlane.xlu0 %1183
        %v1185 = vrcp.pop %v1184
        %v1186 = vmul.f32 %v1181, %v1185
        %1187 = vrot.lane.b32.xlu0 %v603, 48
        %v1188 = vpop.permute.xlu0 %1187
        %v1191 = vsel %vm622, %v1186, 0
        %1193 = vmatprep.subr.mxu0 0.0
        %1194 = vmatpush1.msra.mxu0 0.0
        %1195 = vmatprep.subr.mxu0 0.0
        %1196 = vmatpush1.msra.mxu0 0.0
        %1197 = vmatprep.subr.mxu0 0.0
        %1198 = vmatpush1.msra.mxu0 0.0
        %1199 = vmatprep.subr.mxu0 0.0
        %1200 = vmatpush1.msra.mxu0 0.0
        %1201 = vmatprep.subr.mxu0 0.0
        %1202 = vmatpush1.msra.mxu0 0.0
        %1203 = vmatprep.subr.mxu0 0.0
        %1204 = vmatpush1.msra.mxu0 0.0
        %1205 = vmatprep.subr.mxu0 0.0
        %1206 = vmatpush1.msra.mxu0 0.0
        %1207 = vmatprep.subr.mxu0 0.0
        %1208 = vmatpush1.msra.mxu0 0.0
        %1209 = vmatprep.subr.mxu0 0.0
        %1210 = vmatpush1.msra.mxu0 0.0
        %1211 = vmatprep.subr.mxu0 0.0
        %1212 = vmatpush1.msra.mxu0 0.0
        %1213 = vmatprep.subr.mxu0 0.0
        %1214 = vmatpush1.msra.mxu0 0.0
        %1215 = vmatprep.subr.mxu0 0.0
        %1216 = vmatpush1.msra.mxu0 0.0
        %1217 = vmatprep.subr.mxu0 0.0
        %1218 = vmatpush1.msra.mxu0 0.0
        %1219 = vmatprep.subr.mxu0 0.0
        %1220 = vmatpush1.msra.mxu0 0.0
        %1221 = vmatprep.subr.mxu0 0.0
        %1222 = vmatpush1.msra.mxu0 0.0
        %1223 = vmatprep.subr.mxu0 0.0
        %1224 = vmatpush1.msra.mxu0 %v1188
        %1225 = vmatprep.subr.mxu0 0.0
        %1226 = vmatpush2.msra.mxu0 0.0
        %1227 = vmatprep.subr.mxu0 0.0
        %1228 = vmatpush2.msra.mxu0 0.0
        %1229 = vmatprep.subr.mxu0 0.0
        %1230 = vmatpush2.msra.mxu0 0.0
        %1231 = vmatprep.subr.mxu0 0.0
        %1232 = vmatpush2.msra.mxu0 0.0
        %1233 = vmatprep.subr.mxu0 0.0
        %1234 = vmatpush2.msra.mxu0 0.0
        %1235 = vmatprep.subr.mxu0 0.0
        %1236 = vmatpush2.msra.mxu0 0.0
        %1237 = vmatprep.subr.mxu0 0.0
        %1238 = vmatpush2.msra.mxu0 0.0
        %1239 = vmatprep.subr.mxu0 0.0
        %1240 = vmatpush2.msra.mxu0 0.0
        %1241 = vmatprep.subr.mxu0 0.0
        %1242 = vmatpush2.msra.mxu0 0.0
        %1243 = vmatprep.subr.mxu0 0.0
        %1244 = vmatpush2.msra.mxu0 0.0
        %1245 = vmatprep.subr.mxu0 0.0
        %1246 = vmatpush2.msra.mxu0 0.0
        %1247 = vmatprep.subr.mxu0 0.0
        %1248 = vmatpush2.msra.mxu0 0.0
        %1249 = vmatprep.subr.mxu0 0.0
        %1250 = vmatpush2.msra.mxu0 0.0
        %1251 = vmatprep.subr.mxu0 0.0
        %1252 = vmatpush2.msra.mxu0 0.0
        %1253 = vmatprep.subr.mxu0 0.0
        %1254 = vmatpush2.msra.mxu0 0.0
        %1255 = vmatprep.subr.mxu0 0.0
        %1256 = vmatpush2.msra.mxu0 0.0
        %1257 = vmatprep.mubr.f32.mxu0 0.0
        %1258 = vmatmul.mubr.f32.gmra.mxu0 %v1191
        %v1259 = vpop.f32.mrf.mxu0
        %v1260 = vadd.f32 0.0, %v1259
        %v1261 = vpop.f32.mrf.mxu0
        %1262 = vdwg.mxu0
        %v1264 = vsel %vm622, %v1260, 0
        %1266 = vmatprep.subr.mxu0 0.0
        %1267 = vmatpush1.msra.mxu0 0.0
        %1268 = vmatprep.subr.mxu0 0.0
        %1269 = vmatpush1.msra.mxu0 0.0
        %1270 = vmatprep.subr.mxu0 0.0
        %1271 = vmatpush1.msra.mxu0 0.0
        %1272 = vmatprep.subr.mxu0 0.0
        %1273 = vmatpush1.msra.mxu0 0.0
        %1274 = vmatprep.subr.mxu0 0.0
        %1275 = vmatpush1.msra.mxu0 0.0
        %1276 = vmatprep.subr.mxu0 0.0
        %1277 = vmatpush1.msra.mxu0 0.0
        %1278 = vmatprep.subr.mxu0 0.0
        %1279 = vmatpush1.msra.mxu0 0.0
        %1280 = vmatprep.subr.mxu0 0.0
        %1281 = vmatpush1.msra.mxu0 0.0
        %1282 = vmatprep.subr.mxu0 0.0
        %1283 = vmatpush1.msra.mxu0 0.0
        %1284 = vmatprep.subr.mxu0 0.0
        %1285 = vmatpush1.msra.mxu0 0.0
        %1286 = vmatprep.subr.mxu0 0.0
        %1287 = vmatpush1.msra.mxu0 0.0
        %1288 = vmatprep.subr.mxu0 0.0
        %1289 = vmatpush1.msra.mxu0 0.0
        %1290 = vmatprep.subr.mxu0 0.0
        %1291 = vmatpush1.msra.mxu0 0.0
        %1292 = vmatprep.subr.mxu0 0.0
        %1293 = vmatpush1.msra.mxu0 0.0
        %1294 = vmatprep.subr.mxu0 0.0
        %1295 = vmatpush1.msra.mxu0 0.0
        %1296 = vmatprep.subr.mxu0 0.0
        %1297 = vmatpush1.msra.mxu0 %v609
        %1298 = vmatprep.subr.mxu0 0.0
        %1299 = vmatpush2.msra.mxu0 0.0
        %1300 = vmatprep.subr.mxu0 0.0
        %1301 = vmatpush2.msra.mxu0 0.0
        %1302 = vmatprep.subr.mxu0 0.0
        %1303 = vmatpush2.msra.mxu0 0.0
        %1304 = vmatprep.subr.mxu0 0.0
        %1305 = vmatpush2.msra.mxu0 0.0
        %1306 = vmatprep.subr.mxu0 0.0
        %1307 = vmatpush2.msra.mxu0 0.0
        %1308 = vmatprep.subr.mxu0 0.0
        %1309 = vmatpush2.msra.mxu0 0.0
        %1310 = vmatprep.subr.mxu0 0.0
        %1311 = vmatpush2.msra.mxu0 0.0
        %1312 = vmatprep.subr.mxu0 0.0
        %1313 = vmatpush2.msra.mxu0 0.0
        %1314 = vmatprep.subr.mxu0 0.0
        %1315 = vmatpush2.msra.mxu0 0.0
        %1316 = vmatprep.subr.mxu0 0.0
        %1317 = vmatpush2.msra.mxu0 0.0
        %1318 = vmatprep.subr.mxu0 0.0
        %1319 = vmatpush2.msra.mxu0 0.0
        %1320 = vmatprep.subr.mxu0 0.0
        %1321 = vmatpush2.msra.mxu0 0.0
        %1322 = vmatprep.subr.mxu0 0.0
        %1323 = vmatpush2.msra.mxu0 0.0
        %1324 = vmatprep.subr.mxu0 0.0
        %1325 = vmatpush2.msra.mxu0 0.0
        %1326 = vmatprep.subr.mxu0 0.0
        %1327 = vmatpush2.msra.mxu0 0.0
        %1328 = vmatprep.subr.mxu0 0.0
        %1329 = vmatpush2.msra.mxu0 0.0
        %1330 = vmatprep.mubr.f32.mxu0 0.0
        %1331 = vmatmul.mubr.f32.gmra.mxu0 %v1264
        %v1332 = vpop.f32.mrf.mxu0
        %v1333 = vadd.f32 0.0, %v1332
        %v1334 = vpop.f32.mrf.mxu0
        %1335 = vdwg.mxu0
        %v1336 = vadd.f32 %v1097, %v1333
        %1337 = vrot.lane.b32.xlu0 %v606, 104
        %v1338 = vpop.permute.xlu0 %1337
        %1339 = vrot.lane.b32.xlu0 %v603, 72
        %v1340 = vpop.permute.xlu0 %1339
        %v1341 = vsel %vm622, %v1338, 0
        %v1343 = vsel %vm622, %v1340, 0
        %1345 = vmatprep.subr.mxu0 0.0
        %1346 = vmatpush1.xpose.msra.mxu0 0.0
        %1347 = vmatprep.subr.mxu0 0.0
        %1348 = vmatpush1.xpose.msra.mxu0 0.0
        %1349 = vmatprep.subr.mxu0 0.0
        %1350 = vmatpush1.xpose.msra.mxu0 0.0
        %1351 = vmatprep.subr.mxu0 0.0
        %1352 = vmatpush1.xpose.msra.mxu0 0.0
        %1353 = vmatprep.subr.mxu0 0.0
        %1354 = vmatpush1.xpose.msra.mxu0 0.0
        %1355 = vmatprep.subr.mxu0 0.0
        %1356 = vmatpush1.xpose.msra.mxu0 0.0
        %1357 = vmatprep.subr.mxu0 0.0
        %1358 = vmatpush1.xpose.msra.mxu0 0.0
        %1359 = vmatprep.subr.mxu0 0.0
        %1360 = vmatpush1.xpose.msra.mxu0 0.0
        %1361 = vmatprep.subr.mxu0 0.0
        %1362 = vmatpush1.xpose.msra.mxu0 0.0
        %1363 = vmatprep.subr.mxu0 0.0
        %1364 = vmatpush1.xpose.msra.mxu0 0.0
        %1365 = vmatprep.subr.mxu0 0.0
        %1366 = vmatpush1.xpose.msra.mxu0 0.0
        %1367 = vmatprep.subr.mxu0 0.0
        %1368 = vmatpush1.xpose.msra.mxu0 0.0
        %1369 = vmatprep.subr.mxu0 0.0
        %1370 = vmatpush1.xpose.msra.mxu0 0.0
        %1371 = vmatprep.subr.mxu0 0.0
        %1372 = vmatpush1.xpose.msra.mxu0 0.0
        %1373 = vmatprep.subr.mxu0 0.0
        %1374 = vmatpush1.xpose.msra.mxu0 0.0
        %1375 = vmatprep.subr.mxu0 0.0
        %1376 = vmatpush1.xpose.msra.mxu0 %v1343
        %1377 = vmatprep.subr.mxu0 0.0
        %1378 = vmatpush2.xpose.msra.mxu0 0.0
        %1379 = vmatprep.subr.mxu0 0.0
        %1380 = vmatpush2.xpose.msra.mxu0 0.0
        %1381 = vmatprep.subr.mxu0 0.0
        %1382 = vmatpush2.xpose.msra.mxu0 0.0
        %1383 = vmatprep.subr.mxu0 0.0
        %1384 = vmatpush2.xpose.msra.mxu0 0.0
        %1385 = vmatprep.subr.mxu0 0.0
        %1386 = vmatpush2.xpose.msra.mxu0 0.0
        %1387 = vmatprep.subr.mxu0 0.0
        %1388 = vmatpush2.xpose.msra.mxu0 0.0
        %1389 = vmatprep.subr.mxu0 0.0
        %1390 = vmatpush2.xpose.msra.mxu0 0.0
        %1391 = vmatprep.subr.mxu0 0.0
        %1392 = vmatpush2.xpose.msra.mxu0 0.0
        %1393 = vmatprep.subr.mxu0 0.0
        %1394 = vmatpush2.xpose.msra.mxu0 0.0
        %1395 = vmatprep.subr.mxu0 0.0
        %1396 = vmatpush2.xpose.msra.mxu0 0.0
        %1397 = vmatprep.subr.mxu0 0.0
        %1398 = vmatpush2.xpose.msra.mxu0 0.0
        %1399 = vmatprep.subr.mxu0 0.0
        %1400 = vmatpush2.xpose.msra.mxu0 0.0
        %1401 = vmatprep.subr.mxu0 0.0
        %1402 = vmatpush2.xpose.msra.mxu0 0.0
        %1403 = vmatprep.subr.mxu0 0.0
        %1404 = vmatpush2.xpose.msra.mxu0 0.0
        %1405 = vmatprep.subr.mxu0 0.0
        %1406 = vmatpush2.xpose.msra.mxu0 0.0
        %1407 = vmatprep.subr.mxu0 0.0
        %1408 = vmatpush2.xpose.msra.mxu0 0.0
        %1409 = vmatprep.mubr.f32.mxu0 0.0
        %1410 = vmatmul.mubr.f32.gmra.mxu0 %v1341
        %v1411 = vpop.f32.mrf.mxu0
        %v1412 = vadd.f32 0.0, %v1411
        %v1413 = vpop.f32.mrf.mxu0
        %1414 = vdwg.mxu0
        %v1415 = vsel %vm622, %v1412, -inf
        %1416 = vmax.xlane.f32.xlu0 %v1415
        %v1417 = vpop.xlane.xlu0 %1416
        %v1418 = vsub.f32 %v1412, %v1417
        %v1419 = vmul.f32 %v1418, 1.442695
        %v1420 = vpow.pop %v1419
        %v1421 = vsel %vm622, %v1420, 0.0
        %1422 = vadd.xlane.f32.xlu0 %v1421
        %v1423 = vpop.xlane.xlu0 %1422
        %v1424 = vrcp.pop %v1423
        %v1425 = vmul.f32 %v1420, %v1424
        %1426 = vrot.lane.b32.xlu0 %v603, 40
        %v1427 = vpop.permute.xlu0 %1426
        %v1430 = vsel %vm622, %v1425, 0
        %1432 = vmatprep.subr.mxu0 0.0
        %1433 = vmatpush1.msra.mxu0 0.0
        %1434 = vmatprep.subr.mxu0 0.0
        %1435 = vmatpush1.msra.mxu0 0.0
        %1436 = vmatprep.subr.mxu0 0.0
        %1437 = vmatpush1.msra.mxu0 0.0
        %1438 = vmatprep.subr.mxu0 0.0
        %1439 = vmatpush1.msra.mxu0 0.0
        %1440 = vmatprep.subr.mxu0 0.0
        %1441 = vmatpush1.msra.mxu0 0.0
        %1442 = vmatprep.subr.mxu0 0.0
        %1443 = vmatpush1.msra.mxu0 0.0
        %1444 = vmatprep.subr.mxu0 0.0
        %1445 = vmatpush1.msra.mxu0 0.0
        %1446 = vmatprep.subr.mxu0 0.0
        %1447 = vmatpush1.msra.mxu0 0.0
        %1448 = vmatprep.subr.mxu0 0.0
        %1449 = vmatpush1.msra.mxu0 0.0
        %1450 = vmatprep.subr.mxu0 0.0
        %1451 = vmatpush1.msra.mxu0 0.0
        %1452 = vmatprep.subr.mxu0 0.0
        %1453 = vmatpush1.msra.mxu0 0.0
        %1454 = vmatprep.subr.mxu0 0.0
        %1455 = vmatpush1.msra.mxu0 0.0
        %1456 = vmatprep.subr.mxu0 0.0
        %1457 = vmatpush1.msra.mxu0 0.0
        %1458 = vmatprep.subr.mxu0 0.0
        %1459 = vmatpush1.msra.mxu0 0.0
        %1460 = vmatprep.subr.mxu0 0.0
        %1461 = vmatpush1.msra.mxu0 0.0
        %1462 = vmatprep.subr.mxu0 0.0
        %1463 = vmatpush1.msra.mxu0 %v1427
        %1464 = vmatprep.subr.mxu0 0.0
        %1465 = vmatpush2.msra.mxu0 0.0
        %1466 = vmatprep.subr.mxu0 0.0
        %1467 = vmatpush2.msra.mxu0 0.0
        %1468 = vmatprep.subr.mxu0 0.0
        %1469 = vmatpush2.msra.mxu0 0.0
        %1470 = vmatprep.subr.mxu0 0.0
        %1471 = vmatpush2.msra.mxu0 0.0
        %1472 = vmatprep.subr.mxu0 0.0
        %1473 = vmatpush2.msra.mxu0 0.0
        %1474 = vmatprep.subr.mxu0 0.0
        %1475 = vmatpush2.msra.mxu0 0.0
        %1476 = vmatprep.subr.mxu0 0.0
        %1477 = vmatpush2.msra.mxu0 0.0
        %1478 = vmatprep.subr.mxu0 0.0
        %1479 = vmatpush2.msra.mxu0 0.0
        %1480 = vmatprep.subr.mxu0 0.0
        %1481 = vmatpush2.msra.mxu0 0.0
        %1482 = vmatprep.subr.mxu0 0.0
        %1483 = vmatpush2.msra.mxu0 0.0
        %1484 = vmatprep.subr.mxu0 0.0
        %1485 = vmatpush2.msra.mxu0 0.0
        %1486 = vmatprep.subr.mxu0 0.0
        %1487 = vmatpush2.msra.mxu0 0.0
        %1488 = vmatprep.subr.mxu0 0.0
        %1489 = vmatpush2.msra.mxu0 0.0
        %1490 = vmatprep.subr.mxu0 0.0
        %1491 = vmatpush2.msra.mxu0 0.0
        %1492 = vmatprep.subr.mxu0 0.0
        %1493 = vmatpush2.msra.mxu0 0.0
        %1494 = vmatprep.subr.mxu0 0.0
        %1495 = vmatpush2.msra.mxu0 0.0
        %1496 = vmatprep.mubr.f32.mxu0 0.0
        %1497 = vmatmul.mubr.f32.gmra.mxu0 %v1430
        %v1498 = vpop.f32.mrf.mxu0
        %v1499 = vadd.f32 0.0, %v1498
        %v1500 = vpop.f32.mrf.mxu0
        %1501 = vdwg.mxu0
        %v1503 = vsel %vm622, %v1499, 0
        %1505 = vmatprep.subr.mxu0 0.0
        %1506 = vmatpush1.msra.mxu0 0.0
        %1507 = vmatprep.subr.mxu0 0.0
        %1508 = vmatpush1.msra.mxu0 0.0
        %1509 = vmatprep.subr.mxu0 0.0
        %1510 = vmatpush1.msra.mxu0 0.0
        %1511 = vmatprep.subr.mxu0 0.0
        %1512 = vmatpush1.msra.mxu0 0.0
        %1513 = vmatprep.subr.mxu0 0.0
        %1514 = vmatpush1.msra.mxu0 0.0
        %1515 = vmatprep.subr.mxu0 0.0
        %1516 = vmatpush1.msra.mxu0 0.0
        %1517 = vmatprep.subr.mxu0 0.0
        %1518 = vmatpush1.msra.mxu0 0.0
        %1519 = vmatprep.subr.mxu0 0.0
        %1520 = vmatpush1.msra.mxu0 0.0
        %1521 = vmatprep.subr.mxu0 0.0
        %1522 = vmatpush1.msra.mxu0 0.0
        %1523 = vmatprep.subr.mxu0 0.0
        %1524 = vmatpush1.msra.mxu0 0.0
        %1525 = vmatprep.subr.mxu0 0.0
        %1526 = vmatpush1.msra.mxu0 0.0
        %1527 = vmatprep.subr.mxu0 0.0
        %1528 = vmatpush1.msra.mxu0 0.0
        %1529 = vmatprep.subr.mxu0 0.0
        %1530 = vmatpush1.msra.mxu0 0.0
        %1531 = vmatprep.subr.mxu0 0.0
        %1532 = vmatpush1.msra.mxu0 0.0
        %1533 = vmatprep.subr.mxu0 0.0
        %1534 = vmatpush1.msra.mxu0 0.0
        %1535 = vmatprep.subr.mxu0 0.0
        %1536 = vmatpush1.msra.mxu0 %v610
        %1537 = vmatprep.subr.mxu0 0.0
        %1538 = vmatpush2.msra.mxu0 0.0
        %1539 = vmatprep.subr.mxu0 0.0
        %1540 = vmatpush2.msra.mxu0 0.0
        %1541 = vmatprep.subr.mxu0 0.0
        %1542 = vmatpush2.msra.mxu0 0.0
        %1543 = vmatprep.subr.mxu0 0.0
        %1544 = vmatpush2.msra.mxu0 0.0
        %1545 = vmatprep.subr.mxu0 0.0
        %1546 = vmatpush2.msra.mxu0 0.0
        %1547 = vmatprep.subr.mxu0 0.0
        %1548 = vmatpush2.msra.mxu0 0.0
        %1549 = vmatprep.subr.mxu0 0.0
        %1550 = vmatpush2.msra.mxu0 0.0
        %1551 = vmatprep.subr.mxu0 0.0
        %1552 = vmatpush2.msra.mxu0 0.0
        %1553 = vmatprep.subr.mxu0 0.0
        %1554 = vmatpush2.msra.mxu0 0.0
        %1555 = vmatprep.subr.mxu0 0.0
        %1556 = vmatpush2.msra.mxu0 0.0
        %1557 = vmatprep.subr.mxu0 0.0
        %1558 = vmatpush2.msra.mxu0 0.0
        %1559 = vmatprep.subr.mxu0 0.0
        %1560 = vmatpush2.msra.mxu0 0.0
        %1561 = vmatprep.subr.mxu0 0.0
        %1562 = vmatpush2.msra.mxu0 0.0
        %1563 = vmatprep.subr.mxu0 0.0
        %1564 = vmatpush2.msra.mxu0 0.0
        %1565 = vmatprep.subr.mxu0 0.0
        %1566 = vmatpush2.msra.mxu0 0.0
        %1567 = vmatprep.subr.mxu0 0.0
        %1568 = vmatpush2.msra.mxu0 0.0
        %1569 = vmatprep.mubr.f32.mxu0 0.0
        %1570 = vmatmul.mubr.f32.gmra.mxu0 %v1503
        %v1571 = vpop.f32.mrf.mxu0
        %v1572 = vadd.f32 0.0, %v1571
        %v1573 = vpop.f32.mrf.mxu0
        %1574 = vdwg.mxu0
        %v1575 = vadd.f32 %v1336, %v1572
        %v1576 = vadd.f32 %v520, %v1575
        %v1577 = vsel %vm532, %v1576, 0.0
        %1578 = vadd.xlane.f32.xlu0 %v1577
        %v1579 = vpop.xlane.xlu0 %1578
        %v1580 = vrcp.pop 32.0
        %v1581 = vmul.f32 %v1579, %v1580
        %v1582 = vsub.f32 %v1576, %v1581
        %v1583 = vmul.f32 %v1582, %v1582
        %v1584 = vsel %vm532, %v1583, 0.0
        %1585 = vadd.xlane.f32.xlu0 %v1584
        %v1586 = vpop.xlane.xlu0 %1585
        %v1587 = vmul.f32 %v1586, %v1580
        %v1588 = vadd.f32 %v1587, 1e-05
        %v1589 = vrsqrt.pop %v1588
        %v1590 = vmul.f32 %v1582, %v1589
        %v1591 = vld [vmem:[%s5] sm:$0x1]
        %v1593 = vlaneseq
        %v1594 = vshrl.u32 %v1593, 7
        %v1595 = vsub.s32 0, %v1594
        %v1596 = vrot.slane %v1591, %v1595
        %v1598 = vmul.f32 %v1590, %v1596
        %v1599 = vld [vmem:[%s6] sm:$0x1]
        %v1601 = vlaneseq
        %v1602 = vshrl.u32 %v1601, 7
        %v1603 = vsub.s32 0, %v1602
        %v1604 = vrot.slane %v1599, %v1603
        %v1606 = vadd.f32 %v1598, %v1604
        %v1607 = vld [vmem:[#allocation5] sm:$0xff]
        %v1608 = vld [vmem:[#allocation5 + $0x8] sm:$0xff]
        %v1609 = vld [vmem:[#allocation5 + $0x10] sm:$0xff]
        %v1610 = vld [vmem:[#allocation5 + $0x18] sm:$0xff]
        %v1611 = vld [vmem:[%s8] sm:$0x1]
        %v1613 = vlaneseq
        %v1614 = vshrl.u32 %v1613, 7
        %v1615 = vsub.s32 0, %v1614
        %v1616 = vrot.slane %v1611, %v1615
        %v1619 = vsel %vm532, %v1606, 0
        %1621 = vmatprep.subr.mxu0 0.0
        %1622 = vmatpush1.msra.mxu0 0.0
        %1623 = vmatprep.subr.mxu0 0.0
        %1624 = vmatpush1.msra.mxu0 0.0
        %1625 = vmatprep.subr.mxu0 0.0
        %1626 = vmatpush1.msra.mxu0 0.0
        %1627 = vmatprep.subr.mxu0 0.0
        %1628 = vmatpush1.msra.mxu0 0.0
        %1629 = vmatprep.subr.mxu0 0.0
        %1630 = vmatpush1.msra.mxu0 0.0
        %1631 = vmatprep.subr.mxu0 0.0
        %1632 = vmatpush1.msra.mxu0 0.0
        %1633 = vmatprep.subr.mxu0 0.0
        %1634 = vmatpush1.msra.mxu0 0.0
        %1635 = vmatprep.subr.mxu0 0.0
        %1636 = vmatpush1.msra.mxu0 0.0
        %1637 = vmatprep.subr.mxu0 0.0
        %1638 = vmatpush1.msra.mxu0 0.0
        %1639 = vmatprep.subr.mxu0 0.0
        %1640 = vmatpush1.msra.mxu0 0.0
        %1641 = vmatprep.subr.mxu0 0.0
        %1642 = vmatpush1.msra.mxu0 0.0
        %1643 = vmatprep.subr.mxu0 0.0
        %1644 = vmatpush1.msra.mxu0 0.0
        %1645 = vmatprep.subr.mxu0 0.0
        %1646 = vmatpush1.msra.mxu0 %v1610
        %1647 = vmatprep.subr.mxu0 0.0
        %1648 = vmatpush1.msra.mxu0 %v1609
        %1649 = vmatprep.subr.mxu0 0.0
        %1650 = vmatpush1.msra.mxu0 %v1608
        %1651 = vmatprep.subr.mxu0 0.0
        %1652 = vmatpush1.msra.mxu0 %v1607
        %1653 = vmatprep.subr.mxu0 0.0
        %1654 = vmatpush2.msra.mxu0 0.0
        %1655 = vmatprep.subr.mxu0 0.0
        %1656 = vmatpush2.msra.mxu0 0.0
        %1657 = vmatprep.subr.mxu0 0.0
        %1658 = vmatpush2.msra.mxu0 0.0
        %1659 = vmatprep.subr.mxu0 0.0
        %1660 = vmatpush2.msra.mxu0 0.0
        %1661 = vmatprep.subr.mxu0 0.0
        %1662 = vmatpush2.msra.mxu0 0.0
        %1663 = vmatprep.subr.mxu0 0.0
        %1664 = vmatpush2.msra.mxu0 0.0
        %1665 = vmatprep.subr.mxu0 0.0
        %1666 = vmatpush2.msra.mxu0 0.0
        %1667 = vmatprep.subr.mxu0 0.0
        %1668 = vmatpush2.msra.mxu0 0.0
        %1669 = vmatprep.subr.mxu0 0.0
        %1670 = vmatpush2.msra.mxu0 0.0
        %1671 = vmatprep.subr.mxu0 0.0
        %1672 = vmatpush2.msra.mxu0 0.0
        %1673 = vmatprep.subr.mxu0 0.0
        %1674 = vmatpush2.msra.mxu0 0.0
        %1675 = vmatprep.subr.mxu0 0.0
        %1676 = vmatpush2.msra.mxu0 0.0
        %1677 = vmatprep.subr.mxu0 0.0
        %1678 = vmatpush2.msra.mxu0 0.0
        %1679 = vmatprep.subr.mxu0 0.0
        %1680 = vmatpush2.msra.mxu0 0.0
        %1681 = vmatprep.subr.mxu0 0.0
        %1682 = vmatpush2.msra.mxu0 0.0
        %1683 = vmatprep.subr.mxu0 0.0
        %1684 = vmatpush2.msra.mxu0 0.0
        %1685 = vmatprep.mubr.f32.mxu0 0.0
        %1686 = vmatmul.mubr.f32.gmra.mxu0 %v1619
        %v1687 = vpop.f32.mrf.mxu0
        %v1688 = vadd.f32 %v1616, %v1687
        %v1689 = vpop.f32.mrf.mxu0
        %1690 = vdwg.mxu0
        %v1691 = vmax.f32 %v1688, 0.0
        %v1692 = vld [vmem:[%s9] sm:$0xff]
        %v1693 = vld [vmem:[%s9 + $0x8] sm:$0xff]
        %v1694 = vld [vmem:[%s9 + $0x10] sm:$0xff]
        %v1695 = vld [vmem:[%s9 + $0x18] sm:$0xff]
        %v1696 = vld [vmem:[%s9 + $0x20] sm:$0xff]
        %v1697 = vld [vmem:[%s9 + $0x28] sm:$0xff]
        %v1698 = vld [vmem:[%s9 + $0x30] sm:$0xff]
        %v1699 = vld [vmem:[%s9 + $0x38] sm:$0xff]
        %v1700 = vld [vmem:[%s10] sm:$0x1]
        %v1702 = vlaneseq
        %v1703 = vshrl.u32 %v1702, 7
        %v1704 = vsub.s32 0, %v1703
        %v1705 = vrot.slane %v1700, %v1704
        %vm1707 = vcmask 523264
        %v1709 = vsel %vm1707, %v1691, 0
        %1711 = vmatprep.subr.mxu0 0.0
        %1712 = vmatpush1.msra.mxu0 0.0
        %1713 = vmatprep.subr.mxu0 0.0
        %1714 = vmatpush1.msra.mxu0 0.0
        %1715 = vmatprep.subr.mxu0 0.0
        %1716 = vmatpush1.msra.mxu0 0.0
        %1717 = vmatprep.subr.mxu0 0.0
        %1718 = vmatpush1.msra.mxu0 0.0
        %1719 = vmatprep.subr.mxu0 0.0
        %1720 = vmatpush1.msra.mxu0 0.0
        %1721 = vmatprep.subr.mxu0 0.0
        %1722 = vmatpush1.msra.mxu0 0.0
        %1723 = vmatprep.subr.mxu0 0.0
        %1724 = vmatpush1.msra.mxu0 0.0
        %1725 = vmatprep.subr.mxu0 0.0
        %1726 = vmatpush1.msra.mxu0 0.0
        %1727 = vmatprep.subr.mxu0 0.0
        %1728 = vmatpush1.msra.mxu0 %v1699
        %1729 = vmatprep.subr.mxu0 0.0
        %1730 = vmatpush1.msra.mxu0 %v1698
        %1731 = vmatprep.subr.mxu0 0.0
        %1732 = vmatpush1.msra.mxu0 %v1697
        %1733 = vmatprep.subr.mxu0 0.0
        %1734 = vmatpush1.msra.mxu0 %v1696
        %1735 = vmatprep.subr.mxu0 0.0
        %1736 = vmatpush1.msra.mxu0 %v1695
        %1737 = vmatprep.subr.mxu0 0.0
        %1738 = vmatpush1.msra.mxu0 %v1694
        %1739 = vmatprep.subr.mxu0 0.0
        %1740 = vmatpush1.msra.mxu0 %v1693
        %1741 = vmatprep.subr.mxu0 0.0
        %1742 = vmatpush1.msra.mxu0 %v1692
        %1743 = vmatprep.subr.mxu0 0.0
        %1744 = vmatpush2.msra.mxu0 0.0
        %1745 = vmatprep.subr.mxu0 0.0
        %1746 = vmatpush2.msra.mxu0 0.0
        %1747 = vmatprep.subr.mxu0 0.0
        %1748 = vmatpush2.msra.mxu0 0.0
        %1749 = vmatprep.subr.mxu0 0.0
        %1750 = vmatpush2.msra.mxu0 0.0
        %1751 = vmatprep.subr.mxu0 0.0
        %1752 = vmatpush2.msra.mxu0 0.0
        %1753 = vmatprep.subr.mxu0 0.0
        %1754 = vmatpush2.msra.mxu0 0.0
        %1755 = vmatprep.subr.mxu0 0.0
        %1756 = vmatpush2.msra.mxu0 0.0
        %1757 = vmatprep.subr.mxu0 0.0
        %1758 = vmatpush2.msra.mxu0 0.0
        %1759 = vmatprep.subr.mxu0 0.0
        %1760 = vmatpush2.msra.mxu0 0.0
        %1761 = vmatprep.subr.mxu0 0.0
        %1762 = vmatpush2.msra.mxu0 0.0
        %1763 = vmatprep.subr.mxu0 0.0
        %1764 = vmatpush2.msra.mxu0 0.0
        %1765 = vmatprep.subr.mxu0 0.0
        %1766 = vmatpush2.msra.mxu0 0.0
        %1767 = vmatprep.subr.mxu0 0.0
        %1768 = vmatpush2.msra.mxu0 0.0
        %1769 = vmatprep.subr.mxu0 0.0
        %1770 = vmatpush2.msra.mxu0 0.0
        %1771 = vmatprep.subr.mxu0 0.0
        %1772 = vmatpush2.msra.mxu0 0.0
        %1773 = vmatprep.subr.mxu0 0.0
        %1774 = vmatpush2.msra.mxu0 0.0
        %1775 = vmatprep.mubr.f32.mxu0 0.0
        %1776 = vmatmul.mubr.f32.gmra.mxu0 %v1709
        %v1777 = vpop.f32.mrf.mxu0
        %v1778 = vadd.f32 %v1705, %v1777
        %v1779 = vpop.f32.mrf.mxu0
        %1780 = vdwg.mxu0
        %v1781 = vadd.f32 %v1606, %v1778
        %v1782 = vsel %vm532, %v1781, 0.0
        %1783 = vadd.xlane.f32.xlu0 %v1782
        %v1784 = vpop.xlane.xlu0 %1783
        %v1785 = vmul.f32 %v1784, %v1580
        %v1786 = vsub.f32 %v1781, %v1785
        %v1787 = vmul.f32 %v1786, %v1786
        %v1788 = vsel %vm532, %v1787, 0.0
        %1789 = vadd.xlane.f32.xlu0 %v1788
        %v1790 = vpop.xlane.xlu0 %1789
        %v1791 = vmul.f32 %v1790, %v1580
        %v1792 = vadd.f32 %v1791, 1e-05
        %v1793 = vrsqrt.pop %v1792
        %v1794 = vmul.f32 %v1786, %v1793
        %v1795 = vld [vmem:[%s11] sm:$0x1]
        %v1797 = vlaneseq
        %v1798 = vshrl.u32 %v1797, 7
        %v1799 = vsub.s32 0, %v1798
        %v1800 = vrot.slane %v1795, %v1799
        %v1802 = vmul.f32 %v1794, %v1800
        %v1803 = vld [vmem:[%s12] sm:$0x1]
        %v1805 = vlaneseq
        %v1806 = vshrl.u32 %v1805, 7
        %v1807 = vsub.s32 0, %v1806
        %v1808 = vrot.slane %v1803, %v1807
        %v1810 = vadd.f32 %v1802, %v1808
        %1811 = vst.msk [vmem:[#allocation2] sm:$0xff] %vm532, 0.0
        %vm1812 = vcmask 254976
        %1813 = vst.msk [vmem:[#allocation2 + $0x8] sm:$0x3] %vm1812, 0.0
        %1814 = vst.msk [vmem:[#allocation2 + $0x1] sm:$0xff] %vm532, %v1810
        %v1815 = vld [vmem:[%s14] sm:$0x1]
        %v1817 = vlaneseq
        %v1818 = vshrl.u32 %v1817, 7
        %v1819 = vsub.s32 0, %v1818
        %v1820 = vrot.slane %v1815, %v1819
        %v1822 = vadd.f32 %v1820, 0.0
        %v1823 = vld [vmem:[#allocation2] sm:$0xff]
        %v1824 = vld [vmem:[%s13] sm:$0xff]
        %v1825 = vld [vmem:[%s13 + $0x8] sm:$0xff]
        %v1826 = vld [vmem:[%s13 + $0x10] sm:$0xff]
        %v1827 = vld [vmem:[%s13 + $0x18] sm:$0xff]
        %v1829 = vsel %vm532, %v1823, 0
        %1831 = vmatprep.subr.mxu0 0.0
        %1832 = vmatpush1.msra.mxu0 0.0
        %1833 = vmatprep.subr.mxu0 0.0
        %1834 = vmatpush1.msra.mxu0 0.0
        %1835 = vmatprep.subr.mxu0 0.0
        %1836 = vmatpush1.msra.mxu0 0.0
        %1837 = vmatprep.subr.mxu0 0.0
        %1838 = vmatpush1.msra.mxu0 0.0
        %1839 = vmatprep.subr.mxu0 0.0
        %1840 = vmatpush1.msra.mxu0 0.0
        %1841 = vmatprep.subr.mxu0 0.0
        %1842 = vmatpush1.msra.mxu0 0.0
        %1843 = vmatprep.subr.mxu0 0.0
        %1844 = vmatpush1.msra.mxu0 0.0
        %1845 = vmatprep.subr.mxu0 0.0
        %1846 = vmatpush1.msra.mxu0 0.0
        %1847 = vmatprep.subr.mxu0 0.0
        %1848 = vmatpush1.msra.mxu0 0.0
        %1849 = vmatprep.subr.mxu0 0.0
        %1850 = vmatpush1.msra.mxu0 0.0
        %1851 = vmatprep.subr.mxu0 0.0
        %1852 = vmatpush1.msra.mxu0 0.0
        %1853 = vmatprep.subr.mxu0 0.0
        %1854 = vmatpush1.msra.mxu0 0.0
        %1855 = vmatprep.subr.mxu0 0.0
        %1856 = vmatpush1.msra.mxu0 %v1827
        %1857 = vmatprep.subr.mxu0 0.0
        %1858 = vmatpush1.msra.mxu0 %v1826
        %1859 = vmatprep.subr.mxu0 0.0
        %1860 = vmatpush1.msra.mxu0 %v1825
        %1861 = vmatprep.subr.mxu0 0.0
        %1862 = vmatpush1.msra.mxu0 %v1824
        %1863 = vmatprep.subr.mxu0 0.0
        %1864 = vmatpush2.msra.mxu0 0.0
        %1865 = vmatprep.subr.mxu0 0.0
        %1866 = vmatpush2.msra.mxu0 0.0
        %1867 = vmatprep.subr.mxu0 0.0
        %1868 = vmatpush2.msra.mxu0 0.0
        %1869 = vmatprep.subr.mxu0 0.0
        %1870 = vmatpush2.msra.mxu0 0.0
        %1871 = vmatprep.subr.mxu0 0.0
        %1872 = vmatpush2.msra.mxu0 0.0
        %1873 = vmatprep.subr.mxu0 0.0
        %1874 = vmatpush2.msra.mxu0 0.0
        %1875 = vmatprep.subr.mxu0 0.0
        %1876 = vmatpush2.msra.mxu0 0.0
        %1877 = vmatprep.subr.mxu0 0.0
        %1878 = vmatpush2.msra.mxu0 0.0
        %1879 = vmatprep.subr.mxu0 0.0
        %1880 = vmatpush2.msra.mxu0 0.0
        %1881 = vmatprep.subr.mxu0 0.0
        %1882 = vmatpush2.msra.mxu0 0.0
        %1883 = vmatprep.subr.mxu0 0.0
        %1884 = vmatpush2.msra.mxu0 0.0
        %1885 = vmatprep.subr.mxu0 0.0
        %1886 = vmatpush2.msra.mxu0 0.0
        %1887 = vmatprep.subr.mxu0 0.0
        %1888 = vmatpush2.msra.mxu0 0.0
        %1889 = vmatprep.subr.mxu0 0.0
        %1890 = vmatpush2.msra.mxu0 0.0
        %1891 = vmatprep.subr.mxu0 0.0
        %1892 = vmatpush2.msra.mxu0 0.0
        %1893 = vmatprep.subr.mxu0 0.0
        %1894 = vmatpush2.msra.mxu0 0.0
        %1895 = vmatprep.mubr.f32.mxu0 0.0
        %1896 = vmatmul.mubr.f32.gmra.mxu0 %v1829
        %v1897 = vpop.f32.mrf.mxu0
        %v1898 = vadd.f32 0.0, %v1897
        %v1899 = vpop.f32.mrf.mxu0
        %1900 = vdwg.mxu0
        %v1901 = vadd.f32 %v1822, %v1898
        %v1902 = vld [vmem:[#allocation2 + $0x1] sm:$0xff]
        %s1903 = scalar_lea.vmem %s13, 32
        %v1904 = vld [vmem:[%s1903] sm:$0xff]
        %v1905 = vld [vmem:[%s1903 + $0x8] sm:$0xff]
        %v1906 = vld [vmem:[%s1903 + $0x10] sm:$0xff]
        %v1907 = vld [vmem:[%s1903 + $0x18] sm:$0xff]
        %v1909 = vsel %vm532, %v1902, 0
        %1911 = vmatprep.subr.mxu0 0.0
        %1912 = vmatpush1.msra.mxu0 0.0
        %1913 = vmatprep.subr.mxu0 0.0
        %1914 = vmatpush1.msra.mxu0 0.0
        %1915 = vmatprep.subr.mxu0 0.0
        %1916 = vmatpush1.msra.mxu0 0.0
        %1917 = vmatprep.subr.mxu0 0.0
        %1918 = vmatpush1.msra.mxu0 0.0
        %1919 = vmatprep.subr.mxu0 0.0
        %1920 = vmatpush1.msra.mxu0 0.0
        %1921 = vmatprep.subr.mxu0 0.0
        %1922 = vmatpush1.msra.mxu0 0.0
        %1923 = vmatprep.subr.mxu0 0.0
        %1924 = vmatpush1.msra.mxu0 0.0
        %1925 = vmatprep.subr.mxu0 0.0
        %1926 = vmatpush1.msra.mxu0 0.0
        %1927 = vmatprep.subr.mxu0 0.0
        %1928 = vmatpush1.msra.mxu0 0.0
        %1929 = vmatprep.subr.mxu0 0.0
        %1930 = vmatpush1.msra.mxu0 0.0
        %1931 = vmatprep.subr.mxu0 0.0
        %1932 = vmatpush1.msra.mxu0 0.0
        %1933 = vmatprep.subr.mxu0 0.0
        %1934 = vmatpush1.msra.mxu0 0.0
        %1935 = vmatprep.subr.mxu0 0.0
        %1936 = vmatpush1.msra.mxu0 %v1907
        %1937 = vmatprep.subr.mxu0 0.0
        %1938 = vmatpush1.msra.mxu0 %v1906
        %1939 = vmatprep.subr.mxu0 0.0
        %1940 = vmatpush1.msra.mxu0 %v1905
        %1941 = vmatprep.subr.mxu0 0.0
        %1942 = vmatpush1.msra.mxu0 %v1904
        %1943 = vmatprep.subr.mxu0 0.0
        %1944 = vmatpush2.msra.mxu0 0.0
        %1945 = vmatprep.subr.mxu0 0.0
        %1946 = vmatpush2.msra.mxu0 0.0
        %1947 = vmatprep.subr.mxu0 0.0
        %1948 = vmatpush2.msra.mxu0 0.0
        %1949 = vmatprep.subr.mxu0 0.0
        %1950 = vmatpush2.msra.mxu0 0.0
        %1951 = vmatprep.subr.mxu0 0.0
        %1952 = vmatpush2.msra.mxu0 0.0
        %1953 = vmatprep.subr.mxu0 0.0
        %1954 = vmatpush2.msra.mxu0 0.0
        %1955 = vmatprep.subr.mxu0 0.0
        %1956 = vmatpush2.msra.mxu0 0.0
        %1957 = vmatprep.subr.mxu0 0.0
        %1958 = vmatpush2.msra.mxu0 0.0
        %1959 = vmatprep.subr.mxu0 0.0
        %1960 = vmatpush2.msra.mxu0 0.0
        %1961 = vmatprep.subr.mxu0 0.0
        %1962 = vmatpush2.msra.mxu0 0.0
        %1963 = vmatprep.subr.mxu0 0.0
        %1964 = vmatpush2.msra.mxu0 0.0
        %1965 = vmatprep.subr.mxu0 0.0
        %1966 = vmatpush2.msra.mxu0 0.0
        %1967 = vmatprep.subr.mxu0 0.0
        %1968 = vmatpush2.msra.mxu0 0.0
        %1969 = vmatprep.subr.mxu0 0.0
        %1970 = vmatpush2.msra.mxu0 0.0
        %1971 = vmatprep.subr.mxu0 0.0
        %1972 = vmatpush2.msra.mxu0 0.0
        %1973 = vmatprep.subr.mxu0 0.0
        %1974 = vmatpush2.msra.mxu0 0.0
        %1975 = vmatprep.mubr.f32.mxu0 0.0
        %1976 = vmatmul.mubr.f32.gmra.mxu0 %v1909
        %v1977 = vpop.f32.mrf.mxu0
        %v1978 = vadd.f32 0.0, %v1977
        %v1979 = vpop.f32.mrf.mxu0
        %1980 = vdwg.mxu0
        %v1981 = vadd.f32 %v1901, %v1978
        %v1982 = vld [vmem:[#allocation2 + $0x2] sm:$0xff]
        %s1983 = scalar_lea.vmem %s13, 64
        %v1984 = vld [vmem:[%s1983] sm:$0xff]
        %v1985 = vld [vmem:[%s1983 + $0x8] sm:$0xff]
        %v1986 = vld [vmem:[%s1983 + $0x10] sm:$0xff]
        %v1987 = vld [vmem:[%s1983 + $0x18] sm:$0xff]
        %v1989 = vsel %vm532, %v1982, 0
        %1991 = vmatprep.subr.mxu0 0.0
        %1992 = vmatpush1.msra.mxu0 0.0
        %1993 = vmatprep.subr.mxu0 0.0
        %1994 = vmatpush1.msra.mxu0 0.0
        %1995 = vmatprep.subr.mxu0 0.0
        %1996 = vmatpush1.msra.mxu0 0.0
        %1997 = vmatprep.subr.mxu0 0.0
        %1998 = vmatpush1.msra.mxu0 0.0
        %1999 = vmatprep.subr.mxu0 0.0
        %2000 = vmatpush1.msra.mxu0 0.0
        %2001 = vmatprep.subr.mxu0 0.0
        %2002 = vmatpush1.msra.mxu0 0.0
        %2003 = vmatprep.subr.mxu0 0.0
        %2004 = vmatpush1.msra.mxu0 0.0
        %2005 = vmatprep.subr.mxu0 0.0
        %2006 = vmatpush1.msra.mxu0 0.0
        %2007 = vmatprep.subr.mxu0 0.0
        %2008 = vmatpush1.msra.mxu0 0.0
        %2009 = vmatprep.subr.mxu0 0.0
        %2010 = vmatpush1.msra.mxu0 0.0
        %2011 = vmatprep.subr.mxu0 0.0
        %2012 = vmatpush1.msra.mxu0 0.0
        %2013 = vmatprep.subr.mxu0 0.0
        %2014 = vmatpush1.msra.mxu0 0.0
        %2015 = vmatprep.subr.mxu0 0.0
        %2016 = vmatpush1.msra.mxu0 %v1987
        %2017 = vmatprep.subr.mxu0 0.0
        %2018 = vmatpush1.msra.mxu0 %v1986
        %2019 = vmatprep.subr.mxu0 0.0
        %2020 = vmatpush1.msra.mxu0 %v1985
        %2021 = vmatprep.subr.mxu0 0.0
        %2022 = vmatpush1.msra.mxu0 %v1984
        %2023 = vmatprep.subr.mxu0 0.0
        %2024 = vmatpush2.msra.mxu0 0.0
        %2025 = vmatprep.subr.mxu0 0.0
        %2026 = vmatpush2.msra.mxu0 0.0
        %2027 = vmatprep.subr.mxu0 0.0
        %2028 = vmatpush2.msra.mxu0 0.0
        %2029 = vmatprep.subr.mxu0 0.0
        %2030 = vmatpush2.msra.mxu0 0.0
        %2031 = vmatprep.subr.mxu0 0.0
        %2032 = vmatpush2.msra.mxu0 0.0
        %2033 = vmatprep.subr.mxu0 0.0
        %2034 = vmatpush2.msra.mxu0 0.0
        %2035 = vmatprep.subr.mxu0 0.0
        %2036 = vmatpush2.msra.mxu0 0.0
        %2037 = vmatprep.subr.mxu0 0.0
        %2038 = vmatpush2.msra.mxu0 0.0
        %2039 = vmatprep.subr.mxu0 0.0
        %2040 = vmatpush2.msra.mxu0 0.0
        %2041 = vmatprep.subr.mxu0 0.0
        %2042 = vmatpush2.msra.mxu0 0.0
        %2043 = vmatprep.subr.mxu0 0.0
        %2044 = vmatpush2.msra.mxu0 0.0
        %2045 = vmatprep.subr.mxu0 0.0
        %2046 = vmatpush2.msra.mxu0 0.0
        %2047 = vmatprep.subr.mxu0 0.0
        %2048 = vmatpush2.msra.mxu0 0.0
        %2049 = vmatprep.subr.mxu0 0.0
        %2050 = vmatpush2.msra.mxu0 0.0
        %2051 = vmatprep.subr.mxu0 0.0
        %2052 = vmatpush2.msra.mxu0 0.0
        %2053 = vmatprep.subr.mxu0 0.0
        %2054 = vmatpush2.msra.mxu0 0.0
        %2055 = vmatprep.mubr.f32.mxu0 0.0
        %2056 = vmatmul.mubr.f32.gmra.mxu0 %v1989
        %v2057 = vpop.f32.mrf.mxu0
        %v2058 = vadd.f32 0.0, %v2057
        %v2059 = vpop.f32.mrf.mxu0
        %2060 = vdwg.mxu0
        %v2061 = vadd.f32 %v1981, %v2058
        %v2062 = vmax.f32 %v2061, 0.0
        %2063 = vst.msk [vmem:[%s519] sm:$0xff] %vm532, %v2062
        %p2064 = scmp.lt.s32.totalorder %s28, 1
        %s2065 = scalar_select %p2064, %s28, 1
        %s2066 = smul.addr %s2065, 8
        %s2067 = scalar_lea.vmem %s15, %s2066
        // Predicated region
        $region89: #{transformer_encoder_conv1d_forward.1} parent=79 // pred_check
          %p2068 = pneg %p366
        $region90: #{transformer_encoder_conv1d_forward.1} parent=79 // pred_check_branch
          %2070 = sbr.rel (%p2068) target = $region92
        $region91: #{transformer_encoder_conv1d_forward.1} parent=79 // pred_region
          _
        $region92: #{transformer_encoder_conv1d_forward.1} parent=79 // pred_fallthru
          _
      $region80: #{transformer_encoder_conv1d_forward.1} parent=5 // pred_fallthru
        _
      %p2071 = scmp.le.s32.totalorder 2, %s23
      // Predicated region
      $region93: #{transformer_encoder_conv1d_forward.1} parent=5 // pred_check
        %p2072 = pneg %p2071
      $region94: #{transformer_encoder_conv1d_forward.1} parent=5 // pred_check_branch
        %2074 = sbr.rel (%p2072) target = $region96
      $region95: #{transformer_encoder_conv1d_forward.1} parent=5 // pred_region
        %s2075 = ssub.s32 %s23, 2
        // Predicated region
        $region97: #{transformer_encoder_conv1d_forward.1} parent=95 // pred_check
          %p2076 = pneg %p372
        $region98: #{transformer_encoder_conv1d_forward.1} parent=95 // pred_check_branch
          %2078 = sbr.rel (%p2076) target = $region100
        $region99: #{transformer_encoder_conv1d_forward.1} parent=95 // pred_region
          %p2079 = scmp.lt.s32.totalorder %s29, 1
          %s2080 = scalar_select %p2079, %s29, 1
          %s2081 = smul.addr %s2080, 8
          %s2082 = scalar_lea.vmem %s15, %s2081
        $region100: #{transformer_encoder_conv1d_forward.1} parent=95 // pred_fallthru
          _
      $region96: #{transformer_encoder_conv1d_forward.1} parent=5 // pred_fallthru
        _
    $region6: #{transformer_encoder_conv1d_forward.1} parent=1 // loop_footer
      %s27 = sadd.s32 1, %s23
    $region7: #{transformer_encoder_conv1d_forward.1} parent=1 // loop_footer_branch
      %22 = sbr.rel target = $region3
    $region8: #{transformer_encoder_conv1d_forward.1} parent=1 // loop_exit
      _
    %2083 = vsyncpa [#allocation4], 1
    %s2084 = scalar_lea.sflag [#allocation4], 1
    %2085 = vsyncpa %s2084, 1
    %2086 = vsyncpa [#allocation6], 1

</llo_original>
